<compile_context>
chip_gen: v7x
topology: tpu7x:2x2x1
jax: 0.10.0
libtpu: 0.0.40
codegen_flags: <defaults>
</compile_context>

<pallas_src>
import jax
import jax.numpy as jnp
from jax.experimental import pallas as pl
from jax.experimental.pallas import tpu as pltpu

HIDDEN = 800          # fixed by the module definition
LANE = 128
SUBLANE = 8


def _round_up(n, m):
    return ((n + m - 1) // m) * m


HIDDEN_PAD = _round_up(HIDDEN, LANE)  # 896 -> fully dense lane tiles


def autoencoder_kernel(x_ref,
                       w1_ref, b1_ref,
                       w2_ref, b2_ref,
                       w3_ref, b3_ref,
                       w4_ref, b4_ref,
                       enc_ref, dec_ref):
    # bf16 MXU operands, f32 accumulation; bias / tanh / sigmoid in f32.
    x = x_ref[...]                                             # (TB, c_in_pad) bf16

    # encoder: Linear(in, 800) -> Tanh -> Linear(800, out)
    h1 = jnp.tanh(
        jnp.dot(x, w1_ref[...], preferred_element_type=jnp.float32) + b1_ref[...]
    )
    z = (jnp.dot(h1.astype(jnp.bfloat16), w2_ref[...],
                 preferred_element_type=jnp.float32) + b2_ref[...])

    # decoder takes pre-sigmoid z (matches the PyTorch module):
    # Linear(out, 800) -> Tanh -> Linear(800, in) -> Sigmoid
    h2 = jnp.tanh(
        jnp.dot(z.astype(jnp.bfloat16), w3_ref[...],
                preferred_element_type=jnp.float32) + b3_ref[...]
    )
    dec = jax.nn.sigmoid(
        jnp.dot(h2.astype(jnp.bfloat16), w4_ref[...],
                preferred_element_type=jnp.float32) + b4_ref[...]
    )

    # forward returns (sigmoid(encoded), decoded)
    enc_ref[...] = jax.nn.sigmoid(z)
    dec_ref[...] = dec


def _pad2(a, rows, cols, dtype):
    """Zero-pad a 2-D array to (rows, cols) and cast."""
    r, c = a.shape
    out = jnp.zeros((rows, cols), dtype)
    return out.at[:r, :c].set(a.astype(dtype))


def autoencoder_forward(x, params, *, block_b=None):
    """x: (B, in_channels) float32. params: dict of (in, out) weights + (1, out) biases."""
    B, c_in = x.shape
    c_out = params["w2"].shape[1]
    c_in_p = _round_up(c_in, LANE)
    c_out_p = _round_up(c_out, LANE)

    # Batch tile: big enough for MXU occupancy on large B, multiple of 8 always.
    if block_b is None:
        block_b = 256 if B >= 256 else max(SUBLANE, _round_up(B, SUBLANE))
    B_p = _round_up(B, block_b)

    # Zero-padded, bf16 weights (MXU operands); biases kept f32.  Zero padding of
    # HIDDEN / channel dims cannot change the sliced result (tanh(0)=0 feeds zero
    # rows; padded output columns are sliced off below).
    w1 = _pad2(params["w1"], c_in_p, HIDDEN_PAD, jnp.bfloat16)
    w2 = _pad2(params["w2"], HIDDEN_PAD, c_out_p, jnp.bfloat16)
    w3 = _pad2(params["w3"], c_out_p, HIDDEN_PAD, jnp.bfloat16)
    w4 = _pad2(params["w4"], HIDDEN_PAD, c_in_p, jnp.bfloat16)
    b1 = _pad2(params["b1"], 1, HIDDEN_PAD, jnp.float32)
    b2 = _pad2(params["b2"], 1, c_out_p, jnp.float32)
    b3 = _pad2(params["b3"], 1, HIDDEN_PAD, jnp.float32)
    b4 = _pad2(params["b4"], 1, c_in_p, jnp.float32)

    x_p = jnp.zeros((B_p, c_in_p), jnp.bfloat16).at[:B, :c_in].set(
        x.astype(jnp.bfloat16))

    tiled = lambda shape: pl.BlockSpec(shape, lambda i: (i, 0))       # batch-tiled
    resident = lambda shape: pl.BlockSpec(shape, lambda i: (0, 0))    # stays in VMEM

    grid = (B_p // block_b,)

    enc, dec = pl.pallas_call(
        autoencoder_kernel,
        grid=grid,
        in_specs=[
            tiled((block_b, c_in_p)),
            resident(w1.shape), resident(b1.shape),
            resident(w2.shape), resident(b2.shape),
            resident(w3.shape), resident(b3.shape),
            resident(w4.shape), resident(b4.shape),
        ],
        out_specs=(
            tiled((block_b, c_out_p)),
            tiled((block_b, c_in_p)),
        ),
        out_shape=(
            jax.ShapeDtypeStruct((B_p, c_out_p), jnp.float32),
            jax.ShapeDtypeStruct((B_p, c_in_p), jnp.float32),
        ),
        compiler_params=pltpu.CompilerParams(
            dimension_semantics=("parallel",),   # shard batch axis across TCs on v7x
            vmem_limit_bytes=32 << 20,           # ~1 MiB weights + tiles: plenty of headroom
        ),
    )(x_p, w1, b1, w2, b2, w3, b3, w4, b4)

    # slice away batch / lane padding
    return enc[:B, :c_out], dec[:B, :c_in]


def init_params(key, in_channels, out_channels):
    """Deterministic init mirroring PyTorch Linear shapes; weights stored (in, out)."""
    ks = jax.random.split(key, 8)

    def lin(kw, kb, fan_in, fan_out):
        bound = 1.0 / jnp.sqrt(fan_in)
        w = jax.random.uniform(kw, (fan_in, fan_out), jnp.float32, -bound, bound)
        b = jax.random.uniform(kb, (1, fan_out), jnp.float32, -bound, bound)
        return w, b

    w1, b1 = lin(ks[0], ks[1], in_channels, HIDDEN)
    w2, b2 = lin(ks[2], ks[3], HIDDEN, out_channels)
    w3, b3 = lin(ks[4], ks[5], out_channels, HIDDEN)
    w4, b4 = lin(ks[6], ks[7], HIDDEN, in_channels)
    return dict(w1=w1, b1=b1, w2=w2, b2=b2, w3=w3, b3=b3, w4=w4, b4=b4)


def reference_forward(x, p):
    """Pure-JAX f32 reference matching the PyTorch module semantics."""
    h1 = jnp.tanh(x @ p["w1"] + p["b1"])
    z = h1 @ p["w2"] + p["b2"]
    h2 = jnp.tanh(z @ p["w3"] + p["b3"])
    dec = jax.nn.sigmoid(h2 @ p["w4"] + p["b4"])
    return jax.nn.sigmoid(z), dec


if __name__ == "__main__":
    key = jax.random.PRNGKey(0)
    k_x, k_p = jax.random.split(key)

    B, in_channels, out_channels = 8, 32, 16
    x = jax.random.normal(k_x, (B, in_channels), jnp.float32)
    params = init_params(k_p, in_channels, out_channels)

    enc, dec = autoencoder_forward(x, params)
    jax.block_until_ready((enc, dec))

    enc_ref, dec_ref = reference_forward(x, params)
    assert enc.shape == (B, out_channels) and dec.shape == (B, in_channels)
    # bf16 MXU operands with f32 accumulation -> loosened tolerance vs f32 reference
    assert jnp.allclose(enc, enc_ref, atol=2e-2, rtol=2e-2)
    assert jnp.allclose(dec, dec_ref, atol=2e-2, rtol=2e-2)

    print("KERNEL_OK")
</pallas_src>

<mosaic_0001>
module attributes {stable_mosaic.version = 11 : i64} {
  func.func @autoencoder_kernel(%arg0: i32, %arg1: memref<8x128xbf16, #tpu.memory_space<vmem>>, %arg2: memref<128x896xbf16, #tpu.memory_space<vmem>>, %arg3: memref<1x896xf32, #tpu.memory_space<vmem>>, %arg4: memref<896x128xbf16, #tpu.memory_space<vmem>>, %arg5: memref<1x128xf32, #tpu.memory_space<vmem>>, %arg6: memref<128x896xbf16, #tpu.memory_space<vmem>>, %arg7: memref<1x896xf32, #tpu.memory_space<vmem>>, %arg8: memref<896x128xbf16, #tpu.memory_space<vmem>>, %arg9: memref<1x128xf32, #tpu.memory_space<vmem>>, %arg10: memref<8x128xf32, #tpu.memory_space<vmem>>, %arg11: memref<8x128xf32, #tpu.memory_space<vmem>>) attributes {dimension_semantics = [#tpu.dimension_semantics<parallel>], iteration_bounds = array<i64: 1>, scalar_prefetch = 0 : i64, scratch_operands = 0 : i64, tpu.core_type = #tpu.core_type<tc>, window_params = [{transform_indices = @transform_0, window_bounds = array<i64: 8, 128>}, {pipeline_mode = #tpu.pipeline_mode<synchronous>, transform_indices = @transform_1, window_bounds = array<i64: 128, 896>}, {pipeline_mode = #tpu.pipeline_mode<synchronous>, transform_indices = @transform_2, window_bounds = array<i64: 1, 896>}, {pipeline_mode = #tpu.pipeline_mode<synchronous>, transform_indices = @transform_3, window_bounds = array<i64: 896, 128>}, {pipeline_mode = #tpu.pipeline_mode<synchronous>, transform_indices = @transform_4, window_bounds = array<i64: 1, 128>}, {pipeline_mode = #tpu.pipeline_mode<synchronous>, transform_indices = @transform_5, window_bounds = array<i64: 128, 896>}, {pipeline_mode = #tpu.pipeline_mode<synchronous>, transform_indices = @transform_6, window_bounds = array<i64: 1, 896>}, {pipeline_mode = #tpu.pipeline_mode<synchronous>, transform_indices = @transform_7, window_bounds = array<i64: 896, 128>}, {pipeline_mode = #tpu.pipeline_mode<synchronous>, transform_indices = @transform_8, window_bounds = array<i64: 1, 128>}, {transform_indices = @transform_9, window_bounds = array<i64: 8, 128>}, {transform_indices = @transform_10, window_bounds = array<i64: 8, 128>}]} {
    %c0 = arith.constant 0 : index
    %c0_0 = arith.constant 0 : index
    %0 = vector.load %arg1[%c0, %c0_0] : memref<8x128xbf16, #tpu.memory_space<vmem>>, vector<8x128xbf16>
    %c0_1 = arith.constant 0 : index
    %c0_2 = arith.constant 0 : index
    %1 = vector.load %arg2[%c0_1, %c0_2] : memref<128x896xbf16, #tpu.memory_space<vmem>>, vector<128x896xbf16>
    %cst = arith.constant dense<0.000000e+00> : vector<8x896xf32>
    %2 = tpu.matmul %0, %1, %cst {dimension_numbers = #tpu.dot_dimension_numbers<[1], [0], [0], [1], [0, 0, 1, 1], [], []>} : vector<8x128xbf16>, vector<128x896xbf16>, vector<8x896xf32> -> vector<8x896xf32>
    %c0_3 = arith.constant 0 : index
    %c0_4 = arith.constant 0 : index
    %3 = vector.load %arg3[%c0_3, %c0_4] : memref<1x896xf32, #tpu.memory_space<vmem>>, vector<1x896xf32>
    %4 = vector.broadcast %3 : vector<1x896xf32> to vector<8x896xf32>
    %5 = arith.addf %2, %4 : vector<8x896xf32>
    %6 = math.tanh %5 : vector<8x896xf32>
    %7 = arith.truncf %6 : vector<8x896xf32> to vector<8x896xbf16>
    %c0_5 = arith.constant 0 : index
    %c0_6 = arith.constant 0 : index
    %8 = vector.load %arg4[%c0_5, %c0_6] : memref<896x128xbf16, #tpu.memory_space<vmem>>, vector<896x128xbf16>
    %cst_7 = arith.constant dense<0.000000e+00> : vector<8x128xf32>
    %9 = tpu.matmul %7, %8, %cst_7 {dimension_numbers = #tpu.dot_dimension_numbers<[1], [0], [0], [1], [0, 0, 1, 1], [], []>} : vector<8x896xbf16>, vector<896x128xbf16>, vector<8x128xf32> -> vector<8x128xf32>
    %c0_8 = arith.constant 0 : index
    %c0_9 = arith.constant 0 : index
    %10 = vector.load %arg5[%c0_8, %c0_9] : memref<1x128xf32, #tpu.memory_space<vmem>>, vector<1x128xf32>
    %11 = vector.broadcast %10 : vector<1x128xf32> to vector<8x128xf32>
    %12 = arith.addf %9, %11 : vector<8x128xf32>
    %13 = arith.truncf %12 : vector<8x128xf32> to vector<8x128xbf16>
    %c0_10 = arith.constant 0 : index
    %c0_11 = arith.constant 0 : index
    %14 = vector.load %arg6[%c0_10, %c0_11] : memref<128x896xbf16, #tpu.memory_space<vmem>>, vector<128x896xbf16>
    %cst_12 = arith.constant dense<0.000000e+00> : vector<8x896xf32>
    %15 = tpu.matmul %13, %14, %cst_12 {dimension_numbers = #tpu.dot_dimension_numbers<[1], [0], [0], [1], [0, 0, 1, 1], [], []>} : vector<8x128xbf16>, vector<128x896xbf16>, vector<8x896xf32> -> vector<8x896xf32>
    %c0_13 = arith.constant 0 : index
    %c0_14 = arith.constant 0 : index
    %16 = vector.load %arg7[%c0_13, %c0_14] : memref<1x896xf32, #tpu.memory_space<vmem>>, vector<1x896xf32>
    %17 = vector.broadcast %16 : vector<1x896xf32> to vector<8x896xf32>
    %18 = arith.addf %15, %17 : vector<8x896xf32>
    %19 = math.tanh %18 : vector<8x896xf32>
    %20 = arith.truncf %19 : vector<8x896xf32> to vector<8x896xbf16>
    %c0_15 = arith.constant 0 : index
    %c0_16 = arith.constant 0 : index
    %21 = vector.load %arg8[%c0_15, %c0_16] : memref<896x128xbf16, #tpu.memory_space<vmem>>, vector<896x128xbf16>
    %cst_17 = arith.constant dense<0.000000e+00> : vector<8x128xf32>
    %22 = tpu.matmul %20, %21, %cst_17 {dimension_numbers = #tpu.dot_dimension_numbers<[1], [0], [0], [1], [0, 0, 1, 1], [], []>} : vector<8x896xbf16>, vector<896x128xbf16>, vector<8x128xf32> -> vector<8x128xf32>
    %c0_18 = arith.constant 0 : index
    %c0_19 = arith.constant 0 : index
    %23 = vector.load %arg9[%c0_18, %c0_19] : memref<1x128xf32, #tpu.memory_space<vmem>>, vector<1x128xf32>
    %24 = vector.broadcast %23 : vector<1x128xf32> to vector<8x128xf32>
    %25 = arith.addf %22, %24 : vector<8x128xf32>
    %26 = arith.negf %25 : vector<8x128xf32>
    %27 = math.exp %26 : vector<8x128xf32>
    %cst_20 = arith.constant 1.000000e+00 : f32
    %28 = vector.broadcast %cst_20 : f32 to vector<8x128xf32>
    %29 = arith.addf %28, %27 : vector<8x128xf32>
    %30 = arith.divf %28, %29 : vector<8x128xf32>
    %31 = arith.negf %12 : vector<8x128xf32>
    %32 = math.exp %31 : vector<8x128xf32>
    %cst_21 = arith.constant 1.000000e+00 : f32
    %33 = vector.broadcast %cst_21 : f32 to vector<8x128xf32>
    %34 = arith.addf %33, %32 : vector<8x128xf32>
    %35 = arith.divf %33, %34 : vector<8x128xf32>
    %c0_22 = arith.constant 0 : index
    %c0_23 = arith.constant 0 : index
    %36 = vector.load %arg10[%c0_22, %c0_23] : memref<8x128xf32, #tpu.memory_space<vmem>>, vector<8x128xf32>
    tpu.vector_store %arg10[%c0_22, %c0_23], %35 {strides = array<i32>} : memref<8x128xf32, #tpu.memory_space<vmem>>, vector<8x128xf32>,
    %c0_24 = arith.constant 0 : index
    %c0_25 = arith.constant 0 : index
    %37 = vector.load %arg11[%c0_24, %c0_25] : memref<8x128xf32, #tpu.memory_space<vmem>>, vector<8x128xf32>
    tpu.vector_store %arg11[%c0_24, %c0_25], %30 {strides = array<i32>} : memref<8x128xf32, #tpu.memory_space<vmem>>, vector<8x128xf32>,
    return
  }
  func.func @transform_0(%arg0: i32) -> (i32, i32) {
    %c0_i32 = arith.constant 0 : i32
    %c0_i32_0 = arith.constant 0 : i32
    return %arg0, %c0_i32 : i32, i32
  }
  func.func @transform_1(%arg0: i32) -> (i32, i32) {
    %c0_i32 = arith.constant 0 : i32
    %c0_i32_0 = arith.constant 0 : i32
    %c0_i32_1 = arith.constant 0 : i32
    return %c0_i32, %c0_i32_0 : i32, i32
  }
  func.func @transform_2(%arg0: i32) -> (i32, i32) {
    %c0_i32 = arith.constant 0 : i32
    %c0_i32_0 = arith.constant 0 : i32
    %c0_i32_1 = arith.constant 0 : i32
    return %c0_i32, %c0_i32_0 : i32, i32
  }
  func.func @transform_3(%arg0: i32) -> (i32, i32) {
    %c0_i32 = arith.constant 0 : i32
    %c0_i32_0 = arith.constant 0 : i32
    %c0_i32_1 = arith.constant 0 : i32
    return %c0_i32, %c0_i32_0 : i32, i32
  }
  func.func @transform_4(%arg0: i32) -> (i32, i32) {
    %c0_i32 = arith.constant 0 : i32
    %c0_i32_0 = arith.constant 0 : i32
    %c0_i32_1 = arith.constant 0 : i32
    return %c0_i32, %c0_i32_0 : i32, i32
  }
  func.func @transform_5(%arg0: i32) -> (i32, i32) {
    %c0_i32 = arith.constant 0 : i32
    %c0_i32_0 = arith.constant 0 : i32
    %c0_i32_1 = arith.constant 0 : i32
    return %c0_i32, %c0_i32_0 : i32, i32
  }
  func.func @transform_6(%arg0: i32) -> (i32, i32) {
    %c0_i32 = arith.constant 0 : i32
    %c0_i32_0 = arith.constant 0 : i32
    %c0_i32_1 = arith.constant 0 : i32
    return %c0_i32, %c0_i32_0 : i32, i32
  }
  func.func @transform_7(%arg0: i32) -> (i32, i32) {
    %c0_i32 = arith.constant 0 : i32
    %c0_i32_0 = arith.constant 0 : i32
    %c0_i32_1 = arith.constant 0 : i32
    return %c0_i32, %c0_i32_0 : i32, i32
  }
  func.func @transform_8(%arg0: i32) -> (i32, i32) {
    %c0_i32 = arith.constant 0 : i32
    %c0_i32_0 = arith.constant 0 : i32
    %c0_i32_1 = arith.constant 0 : i32
    return %c0_i32, %c0_i32_0 : i32, i32
  }
  func.func @transform_9(%arg0: i32) -> (i32, i32) {
    %c0_i32 = arith.constant 0 : i32
    %c0_i32_0 = arith.constant 0 : i32
    return %arg0, %c0_i32 : i32, i32
  }
  func.func @transform_10(%arg0: i32) -> (i32, i32) {
    %c0_i32 = arith.constant 0 : i32
    %c0_i32_0 = arith.constant 0 : i32
    return %arg0, %c0_i32 : i32, i32
  }
}

</mosaic_0001>

<llo_original>
// kernel: tpu_custom_call.1
$region0: #{tpu_custom_call.1}
  #allocation0 [shape = 'u32[]', space=smem, size = 0x4, offset = 0x4, fixed_abs, tag = 'smem constant byte address 0x4 - core index']
  #allocation1 [shape = 'u32[144,128]{1,0:T(1,128)}', space=vmem, size = 0x12000, scoped, tag = 'internal scratch']
  %s0 = inlined_call_operand.hbm [shape: bf16[8,128], index: 0, kind: input, shape index: {}]
  %s1 = inlined_call_operand.hbm [shape: bf16[128,896], index: 1, kind: input, shape index: {}]
  %s2 = inlined_call_operand.vmem [shape: f32[1,896], index: 2, kind: input, shape index: {}]
  %s3 = inlined_call_operand.hbm [shape: bf16[896,128], index: 3, kind: input, shape index: {}]
  %s4 = inlined_call_operand.vmem [shape: f32[1,128], index: 4, kind: input, shape index: {}]
  %s5 = inlined_call_operand.hbm [shape: bf16[128,896], index: 5, kind: input, shape index: {}]
  %s6 = inlined_call_operand.vmem [shape: f32[1,896], index: 6, kind: input, shape index: {}]
  %s7 = inlined_call_operand.hbm [shape: bf16[896,128], index: 7, kind: input, shape index: {}]
  %s8 = inlined_call_operand.vmem [shape: f32[1,128], index: 8, kind: input, shape index: {}]
  %s9 = inlined_call_operand.hbm [shape: f32[8,128], index: 9, kind: output, shape index: {0}]
  %s10 = inlined_call_operand.hbm [shape: f32[8,128], index: 10, kind: output, shape index: {1}]
  %11 = xla_tuple %s9, %s10
  %s12 = sld [smem:[#allocation0]]
  $region74: #{tpu_custom_call.1} parent=0
    _
  %s14 = ssub.s32 1, %s12
  %s15 = scalar_select 0, %s14, %s12
  $region1: #{tpu_custom_call.1} parent=0
    #allocation2 [shape = 'u8[2048]{0}', space=vmem, size = 0x800, scoped, tag = 'input window, operand 0, single buffered']
    #allocation3 [shape = 's32[1]{0}', space=sflag, size = 0x4, scoped, tag = 'scoped memory for tpu_custom_call.1']
    #allocation4 [shape = 's32[1]{0}', space=sflag, size = 0x4, scoped, tag = 'scoped memory for tpu_custom_call.1']
    #allocation5 [shape = 'u8[229376]{0}', space=vmem, size = 0x38000, scoped, tag = 'input window, operand 1, single buffered']
    #allocation6 [shape = 's32[1]{0}', space=sflag, size = 0x4, scoped, tag = 'scoped memory for tpu_custom_call.1']
    #allocation7 [shape = 'u8[229376]{0}', space=vmem, size = 0x38000, scoped, tag = 'input window, operand 3, single buffered']
    #allocation8 [shape = 'u8[229376]{0}', space=vmem, size = 0x38000, scoped, tag = 'input window, operand 5, single buffered']
    #allocation9 [shape = 's32[1]{0}', space=sflag, size = 0x4, scoped, tag = 'scoped memory for tpu_custom_call.1']
    #allocation10 [shape = 'u8[229376]{0}', space=vmem, size = 0x38000, scoped, tag = 'input window, operand 7, single buffered']
    #allocation11 [shape = 'u8[4096]{0}', space=vmem, size = 0x1000, scoped, tag = 'output window, operand 0, single buffered']
    #allocation12 [shape = 'u8[4096]{0}', space=vmem, size = 0x1000, scoped, tag = 'output window, operand 1, single buffered']
    #allocation13 [shape = 's32[1]{0}', space=sflag, size = 0x4, scoped, tag = 'scoped memory for tpu_custom_call.1']
    %16 = vsyncpa [#allocation3], 0
    %17 = vsyncpa [#allocation6], 0
    %18 = vsyncpa [#allocation9], 0
    %19 = vsyncpa [#allocation4], 0
    %20 = vsyncpa [#allocation13], 0
    // Predicated region
    $region2: #{tpu_custom_call.1} parent=1 // pred_check
      _
    $region3: #{tpu_custom_call.1} parent=1 // pred_check_branch
      %22 = sbr.rel (0) target = $region5
    $region4: #{tpu_custom_call.1} parent=1 // pred_region
      %s24 = ssub.s32 64, 64
      %25 = vsyncadd [#allocation3], %s24
      %s27 = sshll.u32 [#allocation2], 4
      %s28 = int_to_ptr.vmem [resolvable:$true] %s27
      %30 = dma.hbm_to_vmem [thread:$0]  %s0, 64, %s28, [#allocation3]
    $region5: #{tpu_custom_call.1} parent=1 // pred_fallthru
      _
    // Predicated region
    $region6: #{tpu_custom_call.1} parent=1 // pred_check
      _
    $region7: #{tpu_custom_call.1} parent=1 // pred_check_branch
      %32 = sbr.rel (0) target = $region9
    $region8: #{tpu_custom_call.1} parent=1 // pred_region
      %s34 = ssub.s32 7168, 7168
      %35 = vsyncadd [#allocation6], %s34
      %s36 = sshll.u32 [#allocation5], 4
      %s37 = int_to_ptr.vmem [resolvable:$true] %s36
      %42 = dma.hbm_to_vmem [thread:$0]  %s1, 7168, %s37, [#allocation6], 448, 448, 28
    $region9: #{tpu_custom_call.1} parent=1 // pred_fallthru
      _
    // Predicated region
    $region10: #{tpu_custom_call.1} parent=1 // pred_check
      _
    $region11: #{tpu_custom_call.1} parent=1 // pred_check_branch
      %44 = sbr.rel (0) target = $region13
    $region12: #{tpu_custom_call.1} parent=1 // pred_region
      _
    $region13: #{tpu_custom_call.1} parent=1 // pred_fallthru
      _
    // Predicated region
    $region14: #{tpu_custom_call.1} parent=1 // pred_check
      _
    $region15: #{tpu_custom_call.1} parent=1 // pred_check_branch
      %46 = sbr.rel (0) target = $region17
    $region16: #{tpu_custom_call.1} parent=1 // pred_region
      %s48 = ssub.s32 7168, 7168
      %49 = vsyncadd [#allocation6], %s48
      %s50 = sshll.u32 [#allocation7], 4
      %s51 = int_to_ptr.vmem [resolvable:$true] %s50
      %56 = dma.hbm_to_vmem [thread:$0]  %s3, 7168, %s51, [#allocation6], 64, 64, 4
    $region17: #{tpu_custom_call.1} parent=1 // pred_fallthru
      _
    // Predicated region
    $region18: #{tpu_custom_call.1} parent=1 // pred_check
      _
    $region19: #{tpu_custom_call.1} parent=1 // pred_check_branch
      %58 = sbr.rel (0) target = $region21
    $region20: #{tpu_custom_call.1} parent=1 // pred_region
      _
    $region21: #{tpu_custom_call.1} parent=1 // pred_fallthru
      _
    // Predicated region
    $region22: #{tpu_custom_call.1} parent=1 // pred_check
      _
    $region23: #{tpu_custom_call.1} parent=1 // pred_check_branch
      %60 = sbr.rel (0) target = $region25
    $region24: #{tpu_custom_call.1} parent=1 // pred_region
      %s62 = ssub.s32 7168, 7168
      %63 = vsyncadd [#allocation9], %s62
      %s64 = sshll.u32 [#allocation8], 4
      %s65 = int_to_ptr.vmem [resolvable:$true] %s64
      %70 = dma.hbm_to_vmem [thread:$0]  %s5, 7168, %s65, [#allocation9], 448, 448, 28
    $region25: #{tpu_custom_call.1} parent=1 // pred_fallthru
      _
    // Predicated region
    $region26: #{tpu_custom_call.1} parent=1 // pred_check
      _
    $region27: #{tpu_custom_call.1} parent=1 // pred_check_branch
      %72 = sbr.rel (0) target = $region29
    $region28: #{tpu_custom_call.1} parent=1 // pred_region
      _
    $region29: #{tpu_custom_call.1} parent=1 // pred_fallthru
      _
    // Predicated region
    $region30: #{tpu_custom_call.1} parent=1 // pred_check
      _
    $region31: #{tpu_custom_call.1} parent=1 // pred_check_branch
      %74 = sbr.rel (0) target = $region33
    $region32: #{tpu_custom_call.1} parent=1 // pred_region
      %s76 = ssub.s32 7168, 7168
      %77 = vsyncadd [#allocation9], %s76
      %s78 = sshll.u32 [#allocation10], 4
      %s79 = int_to_ptr.vmem [resolvable:$true] %s78
      %84 = dma.hbm_to_vmem [thread:$0]  %s7, 7168, %s79, [#allocation9], 64, 64, 4
    $region33: #{tpu_custom_call.1} parent=1 // pred_fallthru
      _
    // Predicated region
    $region34: #{tpu_custom_call.1} parent=1 // pred_check
      _
    $region35: #{tpu_custom_call.1} parent=1 // pred_check_branch
      %86 = sbr.rel (0) target = $region37
    $region36: #{tpu_custom_call.1} parent=1 // pred_region
      _
    $region37: #{tpu_custom_call.1} parent=1 // pred_fallthru
      _
    // Predicated region
    $region38: #{tpu_custom_call.1} parent=1 // pred_check
      _
    $region39: #{tpu_custom_call.1} parent=1 // pred_check_branch
      %88 = sbr.rel (0) target = $region41
    $region40: #{tpu_custom_call.1} parent=1 // pred_region
      %89 = dma.done [#allocation3], 64
    $region41: #{tpu_custom_call.1} parent=1 // pred_fallthru
      _
    // Predicated region
    $region42: #{tpu_custom_call.1} parent=1 // pred_check
      _
    $region43: #{tpu_custom_call.1} parent=1 // pred_check_branch
      %91 = sbr.rel (0) target = $region45
    $region44: #{tpu_custom_call.1} parent=1 // pred_region
      %92 = dma.done [#allocation6], 7168
    $region45: #{tpu_custom_call.1} parent=1 // pred_fallthru
      _
    // Predicated region
    $region46: #{tpu_custom_call.1} parent=1 // pred_check
      _
    $region47: #{tpu_custom_call.1} parent=1 // pred_check_branch
      %94 = sbr.rel (0) target = $region49
    $region48: #{tpu_custom_call.1} parent=1 // pred_region
      %95 = dma.done [#allocation6], 7168
    $region49: #{tpu_custom_call.1} parent=1 // pred_fallthru
      _
    // Predicated region
    $region50: #{tpu_custom_call.1} parent=1 // pred_check
      _
    $region51: #{tpu_custom_call.1} parent=1 // pred_check_branch
      %97 = sbr.rel (0) target = $region53
    $region52: #{tpu_custom_call.1} parent=1 // pred_region
      %98 = dma.done [#allocation9], 7168
    $region53: #{tpu_custom_call.1} parent=1 // pred_fallthru
      _
    // Predicated region
    $region54: #{tpu_custom_call.1} parent=1 // pred_check
      _
    $region55: #{tpu_custom_call.1} parent=1 // pred_check_branch
      %100 = sbr.rel (0) target = $region57
    $region56: #{tpu_custom_call.1} parent=1 // pred_region
      %101 = dma.done [#allocation9], 7168
    $region57: #{tpu_custom_call.1} parent=1 // pred_fallthru
      _
    %v103 = vld [vmem:[#allocation2] sm:$0xf]
    %v104 = vld [vmem:[#allocation5] sm:$0xff]
    %v105 = vld [vmem:[#allocation5 + $0x8] sm:$0xff]
    %v106 = vld [vmem:[#allocation5 + $0x10] sm:$0xff]
    %v107 = vld [vmem:[#allocation5 + $0x18] sm:$0xf]
    %v108 = vld [vmem:[#allocation5 + $0x1c] sm:$0xff]
    %v109 = vld [vmem:[#allocation5 + $0x24] sm:$0xff]
    %v110 = vld [vmem:[#allocation5 + $0x2c] sm:$0xff]
    %v111 = vld [vmem:[#allocation5 + $0x34] sm:$0xf]
    %v112 = vld [vmem:[#allocation5 + $0x38] sm:$0xff]
    %v113 = vld [vmem:[#allocation5 + $0x40] sm:$0xff]
    %v114 = vld [vmem:[#allocation5 + $0x48] sm:$0xff]
    %v115 = vld [vmem:[#allocation5 + $0x50] sm:$0xf]
    %v116 = vld [vmem:[#allocation5 + $0x54] sm:$0xff]
    %v117 = vld [vmem:[#allocation5 + $0x5c] sm:$0xff]
    %v118 = vld [vmem:[#allocation5 + $0x64] sm:$0xff]
    %v119 = vld [vmem:[#allocation5 + $0x6c] sm:$0xf]
    %v120 = vld [vmem:[#allocation5 + $0x70] sm:$0xff]
    %v121 = vld [vmem:[#allocation5 + $0x78] sm:$0xff]
    %v122 = vld [vmem:[#allocation5 + $0x80] sm:$0xff]
    %v123 = vld [vmem:[#allocation5 + $0x88] sm:$0xf]
    %v124 = vld [vmem:[#allocation5 + $0x8c] sm:$0xff]
    %v125 = vld [vmem:[#allocation5 + $0x94] sm:$0xff]
    %v126 = vld [vmem:[#allocation5 + $0x9c] sm:$0xff]
    %v127 = vld [vmem:[#allocation5 + $0xa4] sm:$0xf]
    %v128 = vld [vmem:[#allocation5 + $0xa8] sm:$0xff]
    %v129 = vld [vmem:[#allocation5 + $0xb0] sm:$0xff]
    %v130 = vld [vmem:[#allocation5 + $0xb8] sm:$0xff]
    %v131 = vld [vmem:[#allocation5 + $0xc0] sm:$0xf]
    %v132 = vld [vmem:[#allocation5 + $0xc4] sm:$0xff]
    %v133 = vld [vmem:[#allocation5 + $0xcc] sm:$0xff]
    %v134 = vld [vmem:[#allocation5 + $0xd4] sm:$0xff]
    %v135 = vld [vmem:[#allocation5 + $0xdc] sm:$0xf]
    %v136 = vld [vmem:[#allocation5 + $0xe0] sm:$0xff]
    %v137 = vld [vmem:[#allocation5 + $0xe8] sm:$0xff]
    %v138 = vld [vmem:[#allocation5 + $0xf0] sm:$0xff]
    %v139 = vld [vmem:[#allocation5 + $0xf8] sm:$0xf]
    %v140 = vld [vmem:[#allocation5 + $0xfc] sm:$0xff]
    %v141 = vld [vmem:[#allocation5 + $0x104] sm:$0xff]
    %v142 = vld [vmem:[#allocation5 + $0x10c] sm:$0xff]
    %v143 = vld [vmem:[#allocation5 + $0x114] sm:$0xf]
    %v144 = vld [vmem:[#allocation5 + $0x118] sm:$0xff]
    %v145 = vld [vmem:[#allocation5 + $0x120] sm:$0xff]
    %v146 = vld [vmem:[#allocation5 + $0x128] sm:$0xff]
    %v147 = vld [vmem:[#allocation5 + $0x130] sm:$0xf]
    %v148 = vld [vmem:[#allocation5 + $0x134] sm:$0xff]
    %v149 = vld [vmem:[#allocation5 + $0x13c] sm:$0xff]
    %v150 = vld [vmem:[#allocation5 + $0x144] sm:$0xff]
    %v151 = vld [vmem:[#allocation5 + $0x14c] sm:$0xf]
    %v152 = vld [vmem:[#allocation5 + $0x150] sm:$0xff]
    %v153 = vld [vmem:[#allocation5 + $0x158] sm:$0xff]
    %v154 = vld [vmem:[#allocation5 + $0x160] sm:$0xff]
    %v155 = vld [vmem:[#allocation5 + $0x168] sm:$0xf]
    %v156 = vld [vmem:[#allocation5 + $0x16c] sm:$0xff]
    %v157 = vld [vmem:[#allocation5 + $0x174] sm:$0xff]
    %v158 = vld [vmem:[#allocation5 + $0x17c] sm:$0xff]
    %v159 = vld [vmem:[#allocation5 + $0x184] sm:$0xf]
    %v160 = vld [vmem:[#allocation5 + $0x188] sm:$0xff]
    %v161 = vld [vmem:[#allocation5 + $0x190] sm:$0xff]
    %v162 = vld [vmem:[#allocation5 + $0x198] sm:$0xff]
    %v163 = vld [vmem:[#allocation5 + $0x1a0] sm:$0xf]
    %v164 = vld [vmem:[#allocation5 + $0x1a4] sm:$0xff]
    %v165 = vld [vmem:[#allocation5 + $0x1ac] sm:$0xff]
    %v166 = vld [vmem:[#allocation5 + $0x1b4] sm:$0xff]
    %v167 = vld [vmem:[#allocation5 + $0x1bc] sm:$0xf]
    %v168 = vld [vmem:[%s2] sm:$0xff]
    %v170 = vlaneseq
    %v171 = vshrl.u32 %v170, 7
    %v172 = vsub.s32 0, %v171
    %v173 = vrot.slane %v168, %v172
    %v174 = vlaneseq
    %v175 = vshrl.u32 %v174, 7
    %v176 = vsub.s32 1, %v175
    %v177 = vrot.slane %v168, %v176
    %v178 = vlaneseq
    %v179 = vshrl.u32 %v178, 7
    %v180 = vsub.s32 2, %v179
    %v181 = vrot.slane %v168, %v180
    %v182 = vlaneseq
    %v183 = vshrl.u32 %v182, 7
    %v184 = vsub.s32 3, %v183
    %v185 = vrot.slane %v168, %v184
    %v186 = vlaneseq
    %v187 = vshrl.u32 %v186, 7
    %v188 = vsub.s32 4, %v187
    %v189 = vrot.slane %v168, %v188
    %v190 = vlaneseq
    %v191 = vshrl.u32 %v190, 7
    %v192 = vsub.s32 5, %v191
    %v193 = vrot.slane %v168, %v192
    %v194 = vlaneseq
    %v195 = vshrl.u32 %v194, 7
    %v196 = vsub.s32 6, %v195
    %v197 = vrot.slane %v168, %v196
    %v269 = vunpack.c.l.b16 %v104
    %v270 = vunpack.c.h.b16 %v104
    %v271 = vunpack.c.l.b16 %v105
    %v272 = vunpack.c.h.b16 %v105
    %v273 = vunpack.c.l.b16 %v106
    %v274 = vunpack.c.h.b16 %v106
    %v275 = vunpack.c.l.b16 %v107
    %v276 = vunpack.c.l.b16 %v108
    %v277 = vunpack.c.h.b16 %v108
    %v278 = vunpack.c.l.b16 %v109
    %v279 = vunpack.c.h.b16 %v109
    %v280 = vunpack.c.l.b16 %v110
    %v281 = vunpack.c.h.b16 %v110
    %v282 = vunpack.c.l.b16 %v111
    %v283 = vunpack.c.l.b16 %v112
    %v284 = vunpack.c.h.b16 %v112
    %v285 = vunpack.c.l.b16 %v113
    %v286 = vunpack.c.h.b16 %v113
    %v287 = vunpack.c.l.b16 %v114
    %v288 = vunpack.c.h.b16 %v114
    %v289 = vunpack.c.l.b16 %v115
    %v290 = vunpack.c.l.b16 %v116
    %v291 = vunpack.c.h.b16 %v116
    %v292 = vunpack.c.l.b16 %v117
    %v293 = vunpack.c.h.b16 %v117
    %v294 = vunpack.c.l.b16 %v118
    %v295 = vunpack.c.h.b16 %v118
    %v296 = vunpack.c.l.b16 %v119
    %v297 = vunpack.c.l.b16 %v120
    %v298 = vunpack.c.h.b16 %v120
    %v299 = vunpack.c.l.b16 %v121
    %v300 = vunpack.c.h.b16 %v121
    %v301 = vunpack.c.l.b16 %v122
    %v302 = vunpack.c.h.b16 %v122
    %v303 = vunpack.c.l.b16 %v123
    %v304 = vunpack.c.l.b16 %v124
    %v305 = vunpack.c.h.b16 %v124
    %v306 = vunpack.c.l.b16 %v125
    %v307 = vunpack.c.h.b16 %v125
    %v308 = vunpack.c.l.b16 %v126
    %v309 = vunpack.c.h.b16 %v126
    %v310 = vunpack.c.l.b16 %v127
    %v311 = vunpack.c.l.b16 %v128
    %v312 = vunpack.c.h.b16 %v128
    %v313 = vunpack.c.l.b16 %v129
    %v314 = vunpack.c.h.b16 %v129
    %v315 = vunpack.c.l.b16 %v130
    %v316 = vunpack.c.h.b16 %v130
    %v317 = vunpack.c.l.b16 %v131
    %v318 = vunpack.c.l.b16 %v132
    %v319 = vunpack.c.h.b16 %v132
    %v320 = vunpack.c.l.b16 %v133
    %v321 = vunpack.c.h.b16 %v133
    %v322 = vunpack.c.l.b16 %v134
    %v323 = vunpack.c.h.b16 %v134
    %v324 = vunpack.c.l.b16 %v135
    %v325 = vunpack.c.l.b16 %v136
    %v326 = vunpack.c.h.b16 %v136
    %v327 = vunpack.c.l.b16 %v137
    %v328 = vunpack.c.h.b16 %v137
    %v329 = vunpack.c.l.b16 %v138
    %v330 = vunpack.c.h.b16 %v138
    %v331 = vunpack.c.l.b16 %v139
    %v332 = vunpack.c.l.b16 %v140
    %v333 = vunpack.c.h.b16 %v140
    %v334 = vunpack.c.l.b16 %v141
    %v335 = vunpack.c.h.b16 %v141
    %v336 = vunpack.c.l.b16 %v142
    %v337 = vunpack.c.h.b16 %v142
    %v338 = vunpack.c.l.b16 %v143
    %v339 = vunpack.c.l.b16 %v144
    %v340 = vunpack.c.h.b16 %v144
    %v341 = vunpack.c.l.b16 %v145
    %v342 = vunpack.c.h.b16 %v145
    %v343 = vunpack.c.l.b16 %v146
    %v344 = vunpack.c.h.b16 %v146
    %v345 = vunpack.c.l.b16 %v147
    %v346 = vunpack.c.l.b16 %v148
    %v347 = vunpack.c.h.b16 %v148
    %v348 = vunpack.c.l.b16 %v149
    %v349 = vunpack.c.h.b16 %v149
    %v350 = vunpack.c.l.b16 %v150
    %v351 = vunpack.c.h.b16 %v150
    %v352 = vunpack.c.l.b16 %v151
    %v353 = vunpack.c.l.b16 %v152
    %v354 = vunpack.c.h.b16 %v152
    %v355 = vunpack.c.l.b16 %v153
    %v356 = vunpack.c.h.b16 %v153
    %v357 = vunpack.c.l.b16 %v154
    %v358 = vunpack.c.h.b16 %v154
    %v359 = vunpack.c.l.b16 %v155
    %v360 = vunpack.c.l.b16 %v156
    %v361 = vunpack.c.h.b16 %v156
    %v362 = vunpack.c.l.b16 %v157
    %v363 = vunpack.c.h.b16 %v157
    %v364 = vunpack.c.l.b16 %v158
    %v365 = vunpack.c.h.b16 %v158
    %v366 = vunpack.c.l.b16 %v159
    %v367 = vunpack.c.l.b16 %v160
    %v368 = vunpack.c.h.b16 %v160
    %v369 = vunpack.c.l.b16 %v161
    %v370 = vunpack.c.h.b16 %v161
    %v371 = vunpack.c.l.b16 %v162
    %v372 = vunpack.c.h.b16 %v162
    %v373 = vunpack.c.l.b16 %v163
    %v374 = vunpack.c.l.b16 %v164
    %v375 = vunpack.c.h.b16 %v164
    %v376 = vunpack.c.l.b16 %v165
    %v377 = vunpack.c.h.b16 %v165
    %v378 = vunpack.c.l.b16 %v166
    %v379 = vunpack.c.h.b16 %v166
    %v380 = vunpack.c.l.b16 %v167
    %v381 = vpack.c.b16 %v276, %v269
    %v382 = vpack.c.b16 %v277, %v270
    %v383 = vpack.c.b16 %v278, %v271
    %v384 = vpack.c.b16 %v279, %v272
    %v385 = vpack.c.b16 %v280, %v273
    %v386 = vpack.c.b16 %v281, %v274
    %v387 = vpack.c.b16 %v282, %v275
    %v388 = vpack.c.b16 %v290, %v283
    %v389 = vpack.c.b16 %v291, %v284
    %v390 = vpack.c.b16 %v292, %v285
    %v391 = vpack.c.b16 %v293, %v286
    %v392 = vpack.c.b16 %v294, %v287
    %v393 = vpack.c.b16 %v295, %v288
    %v394 = vpack.c.b16 %v296, %v289
    %v395 = vpack.c.b16 %v304, %v297
    %v396 = vpack.c.b16 %v305, %v298
    %v397 = vpack.c.b16 %v306, %v299
    %v398 = vpack.c.b16 %v307, %v300
    %v399 = vpack.c.b16 %v308, %v301
    %v400 = vpack.c.b16 %v309, %v302
    %v401 = vpack.c.b16 %v310, %v303
    %v402 = vpack.c.b16 %v318, %v311
    %v403 = vpack.c.b16 %v319, %v312
    %v404 = vpack.c.b16 %v320, %v313
    %v405 = vpack.c.b16 %v321, %v314
    %v406 = vpack.c.b16 %v322, %v315
    %v407 = vpack.c.b16 %v323, %v316
    %v408 = vpack.c.b16 %v324, %v317
    %v409 = vpack.c.b16 %v332, %v325
    %v410 = vpack.c.b16 %v333, %v326
    %v411 = vpack.c.b16 %v334, %v327
    %v412 = vpack.c.b16 %v335, %v328
    %v413 = vpack.c.b16 %v336, %v329
    %v414 = vpack.c.b16 %v337, %v330
    %v415 = vpack.c.b16 %v338, %v331
    %v416 = vpack.c.b16 %v346, %v339
    %v417 = vpack.c.b16 %v347, %v340
    %v418 = vpack.c.b16 %v348, %v341
    %v419 = vpack.c.b16 %v349, %v342
    %v420 = vpack.c.b16 %v350, %v343
    %v421 = vpack.c.b16 %v351, %v344
    %v422 = vpack.c.b16 %v352, %v345
    %v423 = vpack.c.b16 %v360, %v353
    %v424 = vpack.c.b16 %v361, %v354
    %v425 = vpack.c.b16 %v362, %v355
    %v426 = vpack.c.b16 %v363, %v356
    %v427 = vpack.c.b16 %v364, %v357
    %v428 = vpack.c.b16 %v365, %v358
    %v429 = vpack.c.b16 %v366, %v359
    %v430 = vpack.c.b16 %v374, %v367
    %v431 = vpack.c.b16 %v375, %v368
    %v432 = vpack.c.b16 %v376, %v369
    %v433 = vpack.c.b16 %v377, %v370
    %v434 = vpack.c.b16 %v378, %v371
    %v435 = vpack.c.b16 %v379, %v372
    %v436 = vpack.c.b16 %v380, %v373
    %493 = vmatprep.subr.bf16.mxu0 %v382
    %494 = vmatpush1.bf16.msra.mxu0 %v381
    %495 = vmatprep.subr.bf16.mxu0 %v389
    %496 = vmatpush1.bf16.msra.mxu0 %v388
    %497 = vmatprep.subr.bf16.mxu0 %v396
    %498 = vmatpush1.bf16.msra.mxu0 %v395
    %499 = vmatprep.subr.bf16.mxu0 %v403
    %500 = vmatpush1.bf16.msra.mxu0 %v402
    %501 = vmatprep.subr.bf16.mxu0 %v410
    %502 = vmatpush1.bf16.msra.mxu0 %v409
    %503 = vmatprep.subr.bf16.mxu0 %v417
    %504 = vmatpush1.bf16.msra.mxu0 %v416
    %505 = vmatprep.subr.bf16.mxu0 %v424
    %506 = vmatpush1.bf16.msra.mxu0 %v423
    %507 = vmatprep.subr.bf16.mxu0 %v431
    %508 = vmatpush1.bf16.msra.mxu0 %v430
    %509 = vmatprep.subr.bf16.mxu0 0
    %510 = vmatpush1.bf16.msra.mxu0 0
    %511 = vmatprep.subr.bf16.mxu0 0
    %512 = vmatpush1.bf16.msra.mxu0 0
    %513 = vmatprep.subr.bf16.mxu0 0
    %514 = vmatpush1.bf16.msra.mxu0 0
    %515 = vmatprep.subr.bf16.mxu0 0
    %516 = vmatpush1.bf16.msra.mxu0 0
    %517 = vmatprep.subr.bf16.mxu0 0
    %518 = vmatpush1.bf16.msra.mxu0 0
    %519 = vmatprep.subr.bf16.mxu0 0
    %520 = vmatpush1.bf16.msra.mxu0 0
    %521 = vmatprep.subr.bf16.mxu0 0
    %522 = vmatpush1.bf16.msra.mxu0 0
    %523 = vmatprep.subr.bf16.mxu0 0
    %524 = vmatpush1.bf16.msra.mxu0 0
    %525 = vmatprep.mubr.bf16.mxu0 0
    %526 = vmatmul.mubr.bf16.gmra.mrb[0].mxu0 %v103
    %v527 = vpop.f32.mrb[0].mxu0
    %v528 = vadd.f32 %v173, %v527
    %v529 = vpop.f32.mrb[0].mxu0
    %v530 = vadd.f32 %v177, %v529
    %v531 = vpop.f32.mrb[0].mxu0
    %v532 = vpop.f32.mrb[0].mxu0
    %533 = vdwg.mxu0
    %534 = vmatprep.subr.bf16.mxu0 %v384
    %535 = vmatpush1.bf16.msra.mxu0 %v383
    %536 = vmatprep.subr.bf16.mxu0 %v391
    %537 = vmatpush1.bf16.msra.mxu0 %v390
    %538 = vmatprep.subr.bf16.mxu0 %v398
    %539 = vmatpush1.bf16.msra.mxu0 %v397
    %540 = vmatprep.subr.bf16.mxu0 %v405
    %541 = vmatpush1.bf16.msra.mxu0 %v404
    %542 = vmatprep.subr.bf16.mxu0 %v412
    %543 = vmatpush1.bf16.msra.mxu0 %v411
    %544 = vmatprep.subr.bf16.mxu0 %v419
    %545 = vmatpush1.bf16.msra.mxu0 %v418
    %546 = vmatprep.subr.bf16.mxu0 %v426
    %547 = vmatpush1.bf16.msra.mxu0 %v425
    %548 = vmatprep.subr.bf16.mxu0 %v433
    %549 = vmatpush1.bf16.msra.mxu0 %v432
    %550 = vmatprep.subr.bf16.mxu0 0
    %551 = vmatpush1.bf16.msra.mxu0 0
    %552 = vmatprep.subr.bf16.mxu0 0
    %553 = vmatpush1.bf16.msra.mxu0 0
    %554 = vmatprep.subr.bf16.mxu0 0
    %555 = vmatpush1.bf16.msra.mxu0 0
    %556 = vmatprep.subr.bf16.mxu0 0
    %557 = vmatpush1.bf16.msra.mxu0 0
    %558 = vmatprep.subr.bf16.mxu0 0
    %559 = vmatpush1.bf16.msra.mxu0 0
    %560 = vmatprep.subr.bf16.mxu0 0
    %561 = vmatpush1.bf16.msra.mxu0 0
    %562 = vmatprep.subr.bf16.mxu0 0
    %563 = vmatpush1.bf16.msra.mxu0 0
    %564 = vmatprep.subr.bf16.mxu0 0
    %565 = vmatpush1.bf16.msra.mxu0 0
    %566 = vmatprep.mubr.bf16.mxu0 0
    %567 = vmatmul.mubr.bf16.gmra.mrb[0].mxu0 %v103
    %v568 = vpop.f32.mrb[0].mxu0
    %v569 = vadd.f32 %v181, %v568
    %v570 = vpop.f32.mrb[0].mxu0
    %v571 = vadd.f32 %v185, %v570
    %v572 = vpop.f32.mrb[0].mxu0
    %v573 = vpop.f32.mrb[0].mxu0
    %574 = vdwg.mxu0
    %575 = vmatprep.subr.bf16.mxu0 %v386
    %576 = vmatpush1.bf16.msra.mxu0 %v385
    %577 = vmatprep.subr.bf16.mxu0 %v393
    %578 = vmatpush1.bf16.msra.mxu0 %v392
    %579 = vmatprep.subr.bf16.mxu0 %v400
    %580 = vmatpush1.bf16.msra.mxu0 %v399
    %581 = vmatprep.subr.bf16.mxu0 %v407
    %582 = vmatpush1.bf16.msra.mxu0 %v406
    %583 = vmatprep.subr.bf16.mxu0 %v414
    %584 = vmatpush1.bf16.msra.mxu0 %v413
    %585 = vmatprep.subr.bf16.mxu0 %v421
    %586 = vmatpush1.bf16.msra.mxu0 %v420
    %587 = vmatprep.subr.bf16.mxu0 %v428
    %588 = vmatpush1.bf16.msra.mxu0 %v427
    %589 = vmatprep.subr.bf16.mxu0 %v435
    %590 = vmatpush1.bf16.msra.mxu0 %v434
    %591 = vmatprep.subr.bf16.mxu0 0
    %592 = vmatpush1.bf16.msra.mxu0 0
    %593 = vmatprep.subr.bf16.mxu0 0
    %594 = vmatpush1.bf16.msra.mxu0 0
    %595 = vmatprep.subr.bf16.mxu0 0
    %596 = vmatpush1.bf16.msra.mxu0 0
    %597 = vmatprep.subr.bf16.mxu0 0
    %598 = vmatpush1.bf16.msra.mxu0 0
    %599 = vmatprep.subr.bf16.mxu0 0
    %600 = vmatpush1.bf16.msra.mxu0 0
    %601 = vmatprep.subr.bf16.mxu0 0
    %602 = vmatpush1.bf16.msra.mxu0 0
    %603 = vmatprep.subr.bf16.mxu0 0
    %604 = vmatpush1.bf16.msra.mxu0 0
    %605 = vmatprep.subr.bf16.mxu0 0
    %606 = vmatpush1.bf16.msra.mxu0 0
    %607 = vmatprep.mubr.bf16.mxu0 0
    %608 = vmatmul.mubr.bf16.gmra.mrb[0].mxu0 %v103
    %v609 = vpop.f32.mrb[0].mxu0
    %v610 = vadd.f32 %v189, %v609
    %v611 = vpop.f32.mrb[0].mxu0
    %v612 = vadd.f32 %v193, %v611
    %v613 = vpop.f32.mrb[0].mxu0
    %v614 = vpop.f32.mrb[0].mxu0
    %615 = vdwg.mxu0
    %616 = vmatprep.subr.bf16.mxu0 0
    %617 = vmatpush1.bf16.msra.mxu0 %v387
    %618 = vmatprep.subr.bf16.mxu0 0
    %619 = vmatpush1.bf16.msra.mxu0 %v394
    %620 = vmatprep.subr.bf16.mxu0 0
    %621 = vmatpush1.bf16.msra.mxu0 %v401
    %622 = vmatprep.subr.bf16.mxu0 0
    %623 = vmatpush1.bf16.msra.mxu0 %v408
    %624 = vmatprep.subr.bf16.mxu0 0
    %625 = vmatpush1.bf16.msra.mxu0 %v415
    %626 = vmatprep.subr.bf16.mxu0 0
    %627 = vmatpush1.bf16.msra.mxu0 %v422
    %628 = vmatprep.subr.bf16.mxu0 0
    %629 = vmatpush1.bf16.msra.mxu0 %v429
    %630 = vmatprep.subr.bf16.mxu0 0
    %631 = vmatpush1.bf16.msra.mxu0 %v436
    %632 = vmatprep.subr.bf16.mxu0 0
    %633 = vmatpush1.bf16.msra.mxu0 0
    %634 = vmatprep.subr.bf16.mxu0 0
    %635 = vmatpush1.bf16.msra.mxu0 0
    %636 = vmatprep.subr.bf16.mxu0 0
    %637 = vmatpush1.bf16.msra.mxu0 0
    %638 = vmatprep.subr.bf16.mxu0 0
    %639 = vmatpush1.bf16.msra.mxu0 0
    %640 = vmatprep.subr.bf16.mxu0 0
    %641 = vmatpush1.bf16.msra.mxu0 0
    %642 = vmatprep.subr.bf16.mxu0 0
    %643 = vmatpush1.bf16.msra.mxu0 0
    %644 = vmatprep.subr.bf16.mxu0 0
    %645 = vmatpush1.bf16.msra.mxu0 0
    %646 = vmatprep.subr.bf16.mxu0 0
    %647 = vmatpush1.bf16.msra.mxu0 0
    %648 = vmatprep.mubr.bf16.mxu0 0
    %649 = vmatmul.mubr.bf16.gmra.mrb[0].mxu0 %v103
    %v650 = vpop.f32.mrb[0].mxu0
    %v651 = vadd.f32 %v197, %v650
    %v652 = vpop.f32.mrb[0].mxu0
    %v653 = vpop.f32.mrb[0].mxu0
    %v654 = vpop.f32.mrb[0].mxu0
    %655 = vdwg.mxu0
    %v656 = vtanh.pop %v528
    %v657 = vtanh.pop %v530
    %v658 = vtanh.pop %v569
    %v659 = vtanh.pop %v571
    %v660 = vtanh.pop %v610
    %v661 = vtanh.pop %v612
    %v662 = vtanh.pop %v651
    %v663 = vpack.c.bf16 %v656, %v656
    %v664 = vpack.c.bf16 %v657, %v657
    %v665 = vpack.c.bf16 %v658, %v658
    %v666 = vpack.c.bf16 %v659, %v659
    %v667 = vpack.c.bf16 %v660, %v660
    %v668 = vpack.c.bf16 %v661, %v661
    %v669 = vpack.c.bf16 %v662, %v662
    %v670 = vld [vmem:[#allocation7] sm:$0xf]
    %v671 = vld [vmem:[#allocation7 + $0x4] sm:$0xf]
    %v672 = vld [vmem:[#allocation7 + $0x8] sm:$0xf]
    %v673 = vld [vmem:[#allocation7 + $0xc] sm:$0xf]
    %v674 = vld [vmem:[#allocation7 + $0x10] sm:$0xf]
    %v675 = vld [vmem:[#allocation7 + $0x14] sm:$0xf]
    %v676 = vld [vmem:[#allocation7 + $0x18] sm:$0xf]
    %v677 = vld [vmem:[#allocation7 + $0x1c] sm:$0xf]
    %v678 = vld [vmem:[#allocation7 + $0x20] sm:$0xf]
    %v679 = vld [vmem:[#allocation7 + $0x24] sm:$0xf]
    %v680 = vld [vmem:[#allocation7 + $0x28] sm:$0xf]
    %v681 = vld [vmem:[#allocation7 + $0x2c] sm:$0xf]
    %v682 = vld [vmem:[#allocation7 + $0x30] sm:$0xf]
    %v683 = vld [vmem:[#allocation7 + $0x34] sm:$0xf]
    %v684 = vld [vmem:[#allocation7 + $0x38] sm:$0xf]
    %v685 = vld [vmem:[#allocation7 + $0x3c] sm:$0xf]
    %v686 = vld [vmem:[#allocation7 + $0x40] sm:$0xf]
    %v687 = vld [vmem:[#allocation7 + $0x44] sm:$0xf]
    %v688 = vld [vmem:[#allocation7 + $0x48] sm:$0xf]
    %v689 = vld [vmem:[#allocation7 + $0x4c] sm:$0xf]
    %v690 = vld [vmem:[#allocation7 + $0x50] sm:$0xf]
    %v691 = vld [vmem:[#allocation7 + $0x54] sm:$0xf]
    %v692 = vld [vmem:[#allocation7 + $0x58] sm:$0xf]
    %v693 = vld [vmem:[#allocation7 + $0x5c] sm:$0xf]
    %v694 = vld [vmem:[#allocation7 + $0x60] sm:$0xf]
    %v695 = vld [vmem:[#allocation7 + $0x64] sm:$0xf]
    %v696 = vld [vmem:[#allocation7 + $0x68] sm:$0xf]
    %v697 = vld [vmem:[#allocation7 + $0x6c] sm:$0xf]
    %v698 = vld [vmem:[#allocation7 + $0x70] sm:$0xf]
    %v699 = vld [vmem:[#allocation7 + $0x74] sm:$0xf]
    %v700 = vld [vmem:[#allocation7 + $0x78] sm:$0xf]
    %v701 = vld [vmem:[#allocation7 + $0x7c] sm:$0xf]
    %v702 = vld [vmem:[#allocation7 + $0x80] sm:$0xf]
    %v703 = vld [vmem:[#allocation7 + $0x84] sm:$0xf]
    %v704 = vld [vmem:[#allocation7 + $0x88] sm:$0xf]
    %v705 = vld [vmem:[#allocation7 + $0x8c] sm:$0xf]
    %v706 = vld [vmem:[#allocation7 + $0x90] sm:$0xf]
    %v707 = vld [vmem:[#allocation7 + $0x94] sm:$0xf]
    %v708 = vld [vmem:[#allocation7 + $0x98] sm:$0xf]
    %v709 = vld [vmem:[#allocation7 + $0x9c] sm:$0xf]
    %v710 = vld [vmem:[#allocation7 + $0xa0] sm:$0xf]
    %v711 = vld [vmem:[#allocation7 + $0xa4] sm:$0xf]
    %v712 = vld [vmem:[#allocation7 + $0xa8] sm:$0xf]
    %v713 = vld [vmem:[#allocation7 + $0xac] sm:$0xf]
    %v714 = vld [vmem:[#allocation7 + $0xb0] sm:$0xf]
    %v715 = vld [vmem:[#allocation7 + $0xb4] sm:$0xf]
    %v716 = vld [vmem:[#allocation7 + $0xb8] sm:$0xf]
    %v717 = vld [vmem:[#allocation7 + $0xbc] sm:$0xf]
    %v718 = vld [vmem:[#allocation7 + $0xc0] sm:$0xf]
    %v719 = vld [vmem:[#allocation7 + $0xc4] sm:$0xf]
    %v720 = vld [vmem:[#allocation7 + $0xc8] sm:$0xf]
    %v721 = vld [vmem:[#allocation7 + $0xcc] sm:$0xf]
    %v722 = vld [vmem:[#allocation7 + $0xd0] sm:$0xf]
    %v723 = vld [vmem:[#allocation7 + $0xd4] sm:$0xf]
    %v724 = vld [vmem:[#allocation7 + $0xd8] sm:$0xf]
    %v725 = vld [vmem:[#allocation7 + $0xdc] sm:$0xf]
    %v726 = vld [vmem:[#allocation7 + $0xe0] sm:$0xf]
    %v727 = vld [vmem:[#allocation7 + $0xe4] sm:$0xf]
    %v728 = vld [vmem:[#allocation7 + $0xe8] sm:$0xf]
    %v729 = vld [vmem:[#allocation7 + $0xec] sm:$0xf]
    %v730 = vld [vmem:[#allocation7 + $0xf0] sm:$0xf]
    %v731 = vld [vmem:[#allocation7 + $0xf4] sm:$0xf]
    %v732 = vld [vmem:[#allocation7 + $0xf8] sm:$0xf]
    %v733 = vld [vmem:[#allocation7 + $0xfc] sm:$0xf]
    %v734 = vld [vmem:[#allocation7 + $0x100] sm:$0xf]
    %v735 = vld [vmem:[#allocation7 + $0x104] sm:$0xf]
    %v736 = vld [vmem:[#allocation7 + $0x108] sm:$0xf]
    %v737 = vld [vmem:[#allocation7 + $0x10c] sm:$0xf]
    %v738 = vld [vmem:[#allocation7 + $0x110] sm:$0xf]
    %v739 = vld [vmem:[#allocation7 + $0x114] sm:$0xf]
    %v740 = vld [vmem:[#allocation7 + $0x118] sm:$0xf]
    %v741 = vld [vmem:[#allocation7 + $0x11c] sm:$0xf]
    %v742 = vld [vmem:[#allocation7 + $0x120] sm:$0xf]
    %v743 = vld [vmem:[#allocation7 + $0x124] sm:$0xf]
    %v744 = vld [vmem:[#allocation7 + $0x128] sm:$0xf]
    %v745 = vld [vmem:[#allocation7 + $0x12c] sm:$0xf]
    %v746 = vld [vmem:[#allocation7 + $0x130] sm:$0xf]
    %v747 = vld [vmem:[#allocation7 + $0x134] sm:$0xf]
    %v748 = vld [vmem:[#allocation7 + $0x138] sm:$0xf]
    %v749 = vld [vmem:[#allocation7 + $0x13c] sm:$0xf]
    %v750 = vld [vmem:[#allocation7 + $0x140] sm:$0xf]
    %v751 = vld [vmem:[#allocation7 + $0x144] sm:$0xf]
    %v752 = vld [vmem:[#allocation7 + $0x148] sm:$0xf]
    %v753 = vld [vmem:[#allocation7 + $0x14c] sm:$0xf]
    %v754 = vld [vmem:[#allocation7 + $0x150] sm:$0xf]
    %v755 = vld [vmem:[#allocation7 + $0x154] sm:$0xf]
    %v756 = vld [vmem:[#allocation7 + $0x158] sm:$0xf]
    %v757 = vld [vmem:[#allocation7 + $0x15c] sm:$0xf]
    %v758 = vld [vmem:[#allocation7 + $0x160] sm:$0xf]
    %v759 = vld [vmem:[#allocation7 + $0x164] sm:$0xf]
    %v760 = vld [vmem:[#allocation7 + $0x168] sm:$0xf]
    %v761 = vld [vmem:[#allocation7 + $0x16c] sm:$0xf]
    %v762 = vld [vmem:[#allocation7 + $0x170] sm:$0xf]
    %v763 = vld [vmem:[#allocation7 + $0x174] sm:$0xf]
    %v764 = vld [vmem:[#allocation7 + $0x178] sm:$0xf]
    %v765 = vld [vmem:[#allocation7 + $0x17c] sm:$0xf]
    %v766 = vld [vmem:[#allocation7 + $0x180] sm:$0xf]
    %v767 = vld [vmem:[#allocation7 + $0x184] sm:$0xf]
    %v768 = vld [vmem:[#allocation7 + $0x188] sm:$0xf]
    %v769 = vld [vmem:[#allocation7 + $0x18c] sm:$0xf]
    %v770 = vld [vmem:[#allocation7 + $0x190] sm:$0xf]
    %v771 = vld [vmem:[#allocation7 + $0x194] sm:$0xf]
    %v772 = vld [vmem:[#allocation7 + $0x198] sm:$0xf]
    %v773 = vld [vmem:[#allocation7 + $0x19c] sm:$0xf]
    %v774 = vld [vmem:[#allocation7 + $0x1a0] sm:$0xf]
    %v775 = vld [vmem:[#allocation7 + $0x1a4] sm:$0xf]
    %v776 = vld [vmem:[#allocation7 + $0x1a8] sm:$0xf]
    %v777 = vld [vmem:[#allocation7 + $0x1ac] sm:$0xf]
    %v778 = vld [vmem:[#allocation7 + $0x1b0] sm:$0xf]
    %v779 = vld [vmem:[#allocation7 + $0x1b4] sm:$0xf]
    %v780 = vld [vmem:[#allocation7 + $0x1b8] sm:$0xf]
    %v781 = vld [vmem:[#allocation7 + $0x1bc] sm:$0xf]
    %v782 = vld [vmem:[%s4] sm:$0x1]
    %v784 = vlaneseq
    %v785 = vshrl.u32 %v784, 7
    %v786 = vsub.s32 0, %v785
    %v787 = vrot.slane %v782, %v786
    %v901 = vunpack.c.l.b16 %v670
    %v902 = vunpack.c.l.b16 %v671
    %v903 = vunpack.c.l.b16 %v672
    %v904 = vunpack.c.l.b16 %v673
    %v905 = vunpack.c.l.b16 %v674
    %v906 = vunpack.c.l.b16 %v675
    %v907 = vunpack.c.l.b16 %v676
    %v908 = vunpack.c.l.b16 %v677
    %v909 = vunpack.c.l.b16 %v678
    %v910 = vunpack.c.l.b16 %v679
    %v911 = vunpack.c.l.b16 %v680
    %v912 = vunpack.c.l.b16 %v681
    %v913 = vunpack.c.l.b16 %v682
    %v914 = vunpack.c.l.b16 %v683
    %v915 = vunpack.c.l.b16 %v684
    %v916 = vunpack.c.l.b16 %v685
    %v917 = vunpack.c.l.b16 %v686
    %v918 = vunpack.c.l.b16 %v687
    %v919 = vunpack.c.l.b16 %v688
    %v920 = vunpack.c.l.b16 %v689
    %v921 = vunpack.c.l.b16 %v690
    %v922 = vunpack.c.l.b16 %v691
    %v923 = vunpack.c.l.b16 %v692
    %v924 = vunpack.c.l.b16 %v693
    %v925 = vunpack.c.l.b16 %v694
    %v926 = vunpack.c.l.b16 %v695
    %v927 = vunpack.c.l.b16 %v696
    %v928 = vunpack.c.l.b16 %v697
    %v929 = vunpack.c.l.b16 %v698
    %v930 = vunpack.c.l.b16 %v699
    %v931 = vunpack.c.l.b16 %v700
    %v932 = vunpack.c.l.b16 %v701
    %v933 = vunpack.c.l.b16 %v702
    %v934 = vunpack.c.l.b16 %v703
    %v935 = vunpack.c.l.b16 %v704
    %v936 = vunpack.c.l.b16 %v705
    %v937 = vunpack.c.l.b16 %v706
    %v938 = vunpack.c.l.b16 %v707
    %v939 = vunpack.c.l.b16 %v708
    %v940 = vunpack.c.l.b16 %v709
    %v941 = vunpack.c.l.b16 %v710
    %v942 = vunpack.c.l.b16 %v711
    %v943 = vunpack.c.l.b16 %v712
    %v944 = vunpack.c.l.b16 %v713
    %v945 = vunpack.c.l.b16 %v714
    %v946 = vunpack.c.l.b16 %v715
    %v947 = vunpack.c.l.b16 %v716
    %v948 = vunpack.c.l.b16 %v717
    %v949 = vunpack.c.l.b16 %v718
    %v950 = vunpack.c.l.b16 %v719
    %v951 = vunpack.c.l.b16 %v720
    %v952 = vunpack.c.l.b16 %v721
    %v953 = vunpack.c.l.b16 %v722
    %v954 = vunpack.c.l.b16 %v723
    %v955 = vunpack.c.l.b16 %v724
    %v956 = vunpack.c.l.b16 %v725
    %v957 = vunpack.c.l.b16 %v726
    %v958 = vunpack.c.l.b16 %v727
    %v959 = vunpack.c.l.b16 %v728
    %v960 = vunpack.c.l.b16 %v729
    %v961 = vunpack.c.l.b16 %v730
    %v962 = vunpack.c.l.b16 %v731
    %v963 = vunpack.c.l.b16 %v732
    %v964 = vunpack.c.l.b16 %v733
    %v965 = vunpack.c.l.b16 %v734
    %v966 = vunpack.c.l.b16 %v735
    %v967 = vunpack.c.l.b16 %v736
    %v968 = vunpack.c.l.b16 %v737
    %v969 = vunpack.c.l.b16 %v738
    %v970 = vunpack.c.l.b16 %v739
    %v971 = vunpack.c.l.b16 %v740
    %v972 = vunpack.c.l.b16 %v741
    %v973 = vunpack.c.l.b16 %v742
    %v974 = vunpack.c.l.b16 %v743
    %v975 = vunpack.c.l.b16 %v744
    %v976 = vunpack.c.l.b16 %v745
    %v977 = vunpack.c.l.b16 %v746
    %v978 = vunpack.c.l.b16 %v747
    %v979 = vunpack.c.l.b16 %v748
    %v980 = vunpack.c.l.b16 %v749
    %v981 = vunpack.c.l.b16 %v750
    %v982 = vunpack.c.l.b16 %v751
    %v983 = vunpack.c.l.b16 %v752
    %v984 = vunpack.c.l.b16 %v753
    %v985 = vunpack.c.l.b16 %v754
    %v986 = vunpack.c.l.b16 %v755
    %v987 = vunpack.c.l.b16 %v756
    %v988 = vunpack.c.l.b16 %v757
    %v989 = vunpack.c.l.b16 %v758
    %v990 = vunpack.c.l.b16 %v759
    %v991 = vunpack.c.l.b16 %v760
    %v992 = vunpack.c.l.b16 %v761
    %v993 = vunpack.c.l.b16 %v762
    %v994 = vunpack.c.l.b16 %v763
    %v995 = vunpack.c.l.b16 %v764
    %v996 = vunpack.c.l.b16 %v765
    %v997 = vunpack.c.l.b16 %v766
    %v998 = vunpack.c.l.b16 %v767
    %v999 = vunpack.c.l.b16 %v768
    %v1000 = vunpack.c.l.b16 %v769
    %v1001 = vunpack.c.l.b16 %v770
    %v1002 = vunpack.c.l.b16 %v771
    %v1003 = vunpack.c.l.b16 %v772
    %v1004 = vunpack.c.l.b16 %v773
    %v1005 = vunpack.c.l.b16 %v774
    %v1006 = vunpack.c.l.b16 %v775
    %v1007 = vunpack.c.l.b16 %v776
    %v1008 = vunpack.c.l.b16 %v777
    %v1009 = vunpack.c.l.b16 %v778
    %v1010 = vunpack.c.l.b16 %v779
    %v1011 = vunpack.c.l.b16 %v780
    %v1012 = vunpack.c.l.b16 %v781
    %v1013 = vpack.c.b16 %v902, %v901
    %v1014 = vpack.c.b16 %v904, %v903
    %v1015 = vpack.c.b16 %v906, %v905
    %v1016 = vpack.c.b16 %v908, %v907
    %v1017 = vpack.c.b16 %v910, %v909
    %v1018 = vpack.c.b16 %v912, %v911
    %v1019 = vpack.c.b16 %v914, %v913
    %v1020 = vpack.c.b16 %v916, %v915
    %v1021 = vpack.c.b16 %v918, %v917
    %v1022 = vpack.c.b16 %v920, %v919
    %v1023 = vpack.c.b16 %v922, %v921
    %v1024 = vpack.c.b16 %v924, %v923
    %v1025 = vpack.c.b16 %v926, %v925
    %v1026 = vpack.c.b16 %v928, %v927
    %v1027 = vpack.c.b16 %v930, %v929
    %v1028 = vpack.c.b16 %v932, %v931
    %v1029 = vpack.c.b16 %v934, %v933
    %v1030 = vpack.c.b16 %v936, %v935
    %v1031 = vpack.c.b16 %v938, %v937
    %v1032 = vpack.c.b16 %v940, %v939
    %v1033 = vpack.c.b16 %v942, %v941
    %v1034 = vpack.c.b16 %v944, %v943
    %v1035 = vpack.c.b16 %v946, %v945
    %v1036 = vpack.c.b16 %v948, %v947
    %v1037 = vpack.c.b16 %v950, %v949
    %v1038 = vpack.c.b16 %v952, %v951
    %v1039 = vpack.c.b16 %v954, %v953
    %v1040 = vpack.c.b16 %v956, %v955
    %v1041 = vpack.c.b16 %v958, %v957
    %v1042 = vpack.c.b16 %v960, %v959
    %v1043 = vpack.c.b16 %v962, %v961
    %v1044 = vpack.c.b16 %v964, %v963
    %v1045 = vpack.c.b16 %v966, %v965
    %v1046 = vpack.c.b16 %v968, %v967
    %v1047 = vpack.c.b16 %v970, %v969
    %v1048 = vpack.c.b16 %v972, %v971
    %v1049 = vpack.c.b16 %v974, %v973
    %v1050 = vpack.c.b16 %v976, %v975
    %v1051 = vpack.c.b16 %v978, %v977
    %v1052 = vpack.c.b16 %v980, %v979
    %v1053 = vpack.c.b16 %v982, %v981
    %v1054 = vpack.c.b16 %v984, %v983
    %v1055 = vpack.c.b16 %v986, %v985
    %v1056 = vpack.c.b16 %v988, %v987
    %v1057 = vpack.c.b16 %v990, %v989
    %v1058 = vpack.c.b16 %v992, %v991
    %v1059 = vpack.c.b16 %v994, %v993
    %v1060 = vpack.c.b16 %v996, %v995
    %v1061 = vpack.c.b16 %v998, %v997
    %v1062 = vpack.c.b16 %v1000, %v999
    %v1063 = vpack.c.b16 %v1002, %v1001
    %v1064 = vpack.c.b16 %v1004, %v1003
    %v1065 = vpack.c.b16 %v1006, %v1005
    %v1066 = vpack.c.b16 %v1008, %v1007
    %v1067 = vpack.c.b16 %v1010, %v1009
    %v1068 = vpack.c.b16 %v1012, %v1011
    %1125 = vmatprep.subr.bf16.mxu0 0
    %1126 = vmatpush1.bf16.msra.mxu0 %v1013
    %1127 = vmatprep.subr.bf16.mxu0 0
    %1128 = vmatpush1.bf16.msra.mxu0 %v1014
    %1129 = vmatprep.subr.bf16.mxu0 0
    %1130 = vmatpush1.bf16.msra.mxu0 %v1015
    %1131 = vmatprep.subr.bf16.mxu0 0
    %1132 = vmatpush1.bf16.msra.mxu0 %v1016
    %1133 = vmatprep.subr.bf16.mxu0 0
    %1134 = vmatpush1.bf16.msra.mxu0 %v1017
    %1135 = vmatprep.subr.bf16.mxu0 0
    %1136 = vmatpush1.bf16.msra.mxu0 %v1018
    %1137 = vmatprep.subr.bf16.mxu0 0
    %1138 = vmatpush1.bf16.msra.mxu0 %v1019
    %1139 = vmatprep.subr.bf16.mxu0 0
    %1140 = vmatpush1.bf16.msra.mxu0 %v1020
    %1141 = vmatprep.subr.bf16.mxu0 0
    %1142 = vmatpush1.bf16.msra.mxu0 %v1021
    %1143 = vmatprep.subr.bf16.mxu0 0
    %1144 = vmatpush1.bf16.msra.mxu0 %v1022
    %1145 = vmatprep.subr.bf16.mxu0 0
    %1146 = vmatpush1.bf16.msra.mxu0 %v1023
    %1147 = vmatprep.subr.bf16.mxu0 0
    %1148 = vmatpush1.bf16.msra.mxu0 %v1024
    %1149 = vmatprep.subr.bf16.mxu0 0
    %1150 = vmatpush1.bf16.msra.mxu0 %v1025
    %1151 = vmatprep.subr.bf16.mxu0 0
    %1152 = vmatpush1.bf16.msra.mxu0 %v1026
    %1153 = vmatprep.subr.bf16.mxu0 0
    %1154 = vmatpush1.bf16.msra.mxu0 %v1027
    %1155 = vmatprep.subr.bf16.mxu0 0
    %1156 = vmatpush1.bf16.msra.mxu0 %v1028
    %1157 = vmatprep.mubr.bf16.mxu0 %v664
    %1158 = vmatmul.mubr.bf16.gmra.mrb[0].mxu0 %v663
    %v1159 = vpop.f32.mrb[0].mxu0
    %v1160 = vadd.f32 %v787, %v1159
    %v1161 = vpop.f32.mrb[0].mxu0
    %v1162 = vpop.f32.mrb[0].mxu0
    %v1163 = vpop.f32.mrb[0].mxu0
    %1164 = vdwg.mxu0
    %1165 = vmatprep.subr.bf16.mxu0 0
    %1166 = vmatpush1.bf16.msra.mxu0 %v1029
    %1167 = vmatprep.subr.bf16.mxu0 0
    %1168 = vmatpush1.bf16.msra.mxu0 %v1030
    %1169 = vmatprep.subr.bf16.mxu0 0
    %1170 = vmatpush1.bf16.msra.mxu0 %v1031
    %1171 = vmatprep.subr.bf16.mxu0 0
    %1172 = vmatpush1.bf16.msra.mxu0 %v1032
    %1173 = vmatprep.subr.bf16.mxu0 0
    %1174 = vmatpush1.bf16.msra.mxu0 %v1033
    %1175 = vmatprep.subr.bf16.mxu0 0
    %1176 = vmatpush1.bf16.msra.mxu0 %v1034
    %1177 = vmatprep.subr.bf16.mxu0 0
    %1178 = vmatpush1.bf16.msra.mxu0 %v1035
    %1179 = vmatprep.subr.bf16.mxu0 0
    %1180 = vmatpush1.bf16.msra.mxu0 %v1036
    %1181 = vmatprep.subr.bf16.mxu0 0
    %1182 = vmatpush1.bf16.msra.mxu0 %v1037
    %1183 = vmatprep.subr.bf16.mxu0 0
    %1184 = vmatpush1.bf16.msra.mxu0 %v1038
    %1185 = vmatprep.subr.bf16.mxu0 0
    %1186 = vmatpush1.bf16.msra.mxu0 %v1039
    %1187 = vmatprep.subr.bf16.mxu0 0
    %1188 = vmatpush1.bf16.msra.mxu0 %v1040
    %1189 = vmatprep.subr.bf16.mxu0 0
    %1190 = vmatpush1.bf16.msra.mxu0 %v1041
    %1191 = vmatprep.subr.bf16.mxu0 0
    %1192 = vmatpush1.bf16.msra.mxu0 %v1042
    %1193 = vmatprep.subr.bf16.mxu0 0
    %1194 = vmatpush1.bf16.msra.mxu0 %v1043
    %1195 = vmatprep.subr.bf16.mxu0 0
    %1196 = vmatpush1.bf16.msra.mxu0 %v1044
    %1197 = vmatprep.mubr.bf16.mxu0 %v666
    %1198 = vmatmul.mubr.bf16.gmra.mrb[0].mxu0 %v665
    %v1199 = vpop.f32.mrb[0].mxu0
    %v1200 = vadd.f32 %v1160, %v1199
    %v1201 = vpop.f32.mrb[0].mxu0
    %v1202 = vpop.f32.mrb[0].mxu0
    %v1203 = vpop.f32.mrb[0].mxu0
    %1204 = vdwg.mxu0
    %1205 = vmatprep.subr.bf16.mxu0 0
    %1206 = vmatpush1.bf16.msra.mxu0 %v1045
    %1207 = vmatprep.subr.bf16.mxu0 0
    %1208 = vmatpush1.bf16.msra.mxu0 %v1046
    %1209 = vmatprep.subr.bf16.mxu0 0
    %1210 = vmatpush1.bf16.msra.mxu0 %v1047
    %1211 = vmatprep.subr.bf16.mxu0 0
    %1212 = vmatpush1.bf16.msra.mxu0 %v1048
    %1213 = vmatprep.subr.bf16.mxu0 0
    %1214 = vmatpush1.bf16.msra.mxu0 %v1049
    %1215 = vmatprep.subr.bf16.mxu0 0
    %1216 = vmatpush1.bf16.msra.mxu0 %v1050
    %1217 = vmatprep.subr.bf16.mxu0 0
    %1218 = vmatpush1.bf16.msra.mxu0 %v1051
    %1219 = vmatprep.subr.bf16.mxu0 0
    %1220 = vmatpush1.bf16.msra.mxu0 %v1052
    %1221 = vmatprep.subr.bf16.mxu0 0
    %1222 = vmatpush1.bf16.msra.mxu0 %v1053
    %1223 = vmatprep.subr.bf16.mxu0 0
    %1224 = vmatpush1.bf16.msra.mxu0 %v1054
    %1225 = vmatprep.subr.bf16.mxu0 0
    %1226 = vmatpush1.bf16.msra.mxu0 %v1055
    %1227 = vmatprep.subr.bf16.mxu0 0
    %1228 = vmatpush1.bf16.msra.mxu0 %v1056
    %1229 = vmatprep.subr.bf16.mxu0 0
    %1230 = vmatpush1.bf16.msra.mxu0 %v1057
    %1231 = vmatprep.subr.bf16.mxu0 0
    %1232 = vmatpush1.bf16.msra.mxu0 %v1058
    %1233 = vmatprep.subr.bf16.mxu0 0
    %1234 = vmatpush1.bf16.msra.mxu0 %v1059
    %1235 = vmatprep.subr.bf16.mxu0 0
    %1236 = vmatpush1.bf16.msra.mxu0 %v1060
    %1237 = vmatprep.mubr.bf16.mxu0 %v668
    %1238 = vmatmul.mubr.bf16.gmra.mrb[0].mxu0 %v667
    %v1239 = vpop.f32.mrb[0].mxu0
    %v1240 = vadd.f32 %v1200, %v1239
    %v1241 = vpop.f32.mrb[0].mxu0
    %v1242 = vpop.f32.mrb[0].mxu0
    %v1243 = vpop.f32.mrb[0].mxu0
    %1244 = vdwg.mxu0
    %1245 = vmatprep.subr.bf16.mxu0 0
    %1246 = vmatpush1.bf16.msra.mxu0 %v1061
    %1247 = vmatprep.subr.bf16.mxu0 0
    %1248 = vmatpush1.bf16.msra.mxu0 %v1062
    %1249 = vmatprep.subr.bf16.mxu0 0
    %1250 = vmatpush1.bf16.msra.mxu0 %v1063
    %1251 = vmatprep.subr.bf16.mxu0 0
    %1252 = vmatpush1.bf16.msra.mxu0 %v1064
    %1253 = vmatprep.subr.bf16.mxu0 0
    %1254 = vmatpush1.bf16.msra.mxu0 %v1065
    %1255 = vmatprep.subr.bf16.mxu0 0
    %1256 = vmatpush1.bf16.msra.mxu0 %v1066
    %1257 = vmatprep.subr.bf16.mxu0 0
    %1258 = vmatpush1.bf16.msra.mxu0 %v1067
    %1259 = vmatprep.subr.bf16.mxu0 0
    %1260 = vmatpush1.bf16.msra.mxu0 %v1068
    %1261 = vmatprep.subr.bf16.mxu0 0
    %1262 = vmatpush1.bf16.msra.mxu0 0
    %1263 = vmatprep.subr.bf16.mxu0 0
    %1264 = vmatpush1.bf16.msra.mxu0 0
    %1265 = vmatprep.subr.bf16.mxu0 0
    %1266 = vmatpush1.bf16.msra.mxu0 0
    %1267 = vmatprep.subr.bf16.mxu0 0
    %1268 = vmatpush1.bf16.msra.mxu0 0
    %1269 = vmatprep.subr.bf16.mxu0 0
    %1270 = vmatpush1.bf16.msra.mxu0 0
    %1271 = vmatprep.subr.bf16.mxu0 0
    %1272 = vmatpush1.bf16.msra.mxu0 0
    %1273 = vmatprep.subr.bf16.mxu0 0
    %1274 = vmatpush1.bf16.msra.mxu0 0
    %1275 = vmatprep.subr.bf16.mxu0 0
    %1276 = vmatpush1.bf16.msra.mxu0 0
    %1277 = vmatprep.mubr.bf16.mxu0 0
    %1278 = vmatmul.mubr.bf16.gmra.mrb[0].mxu0 %v669
    %v1279 = vpop.f32.mrb[0].mxu0
    %v1280 = vadd.f32 %v1240, %v1279
    %v1281 = vpop.f32.mrb[0].mxu0
    %v1282 = vpop.f32.mrb[0].mxu0
    %v1283 = vpop.f32.mrb[0].mxu0
    %1284 = vdwg.mxu0
    %v1285 = vpack.c.bf16 %v1280, %v1280
    %v1286 = vld [vmem:[#allocation8] sm:$0xff]
    %v1287 = vld [vmem:[#allocation8 + $0x8] sm:$0xff]
    %v1288 = vld [vmem:[#allocation8 + $0x10] sm:$0xff]
    %v1289 = vld [vmem:[#allocation8 + $0x18] sm:$0xf]
    %v1290 = vld [vmem:[#allocation8 + $0x1c] sm:$0xff]
    %v1291 = vld [vmem:[#allocation8 + $0x24] sm:$0xff]
    %v1292 = vld [vmem:[#allocation8 + $0x2c] sm:$0xff]
    %v1293 = vld [vmem:[#allocation8 + $0x34] sm:$0xf]
    %v1294 = vld [vmem:[#allocation8 + $0x38] sm:$0xff]
    %v1295 = vld [vmem:[#allocation8 + $0x40] sm:$0xff]
    %v1296 = vld [vmem:[#allocation8 + $0x48] sm:$0xff]
    %v1297 = vld [vmem:[#allocation8 + $0x50] sm:$0xf]
    %v1298 = vld [vmem:[#allocation8 + $0x54] sm:$0xff]
    %v1299 = vld [vmem:[#allocation8 + $0x5c] sm:$0xff]
    %v1300 = vld [vmem:[#allocation8 + $0x64] sm:$0xff]
    %v1301 = vld [vmem:[#allocation8 + $0x6c] sm:$0xf]
    %v1302 = vld [vmem:[#allocation8 + $0x70] sm:$0xff]
    %v1303 = vld [vmem:[#allocation8 + $0x78] sm:$0xff]
    %v1304 = vld [vmem:[#allocation8 + $0x80] sm:$0xff]
    %v1305 = vld [vmem:[#allocation8 + $0x88] sm:$0xf]
    %v1306 = vld [vmem:[#allocation8 + $0x8c] sm:$0xff]
    %v1307 = vld [vmem:[#allocation8 + $0x94] sm:$0xff]
    %v1308 = vld [vmem:[#allocation8 + $0x9c] sm:$0xff]
    %v1309 = vld [vmem:[#allocation8 + $0xa4] sm:$0xf]
    %v1310 = vld [vmem:[#allocation8 + $0xa8] sm:$0xff]
    %v1311 = vld [vmem:[#allocation8 + $0xb0] sm:$0xff]
    %v1312 = vld [vmem:[#allocation8 + $0xb8] sm:$0xff]
    %v1313 = vld [vmem:[#allocation8 + $0xc0] sm:$0xf]
    %v1314 = vld [vmem:[#allocation8 + $0xc4] sm:$0xff]
    %v1315 = vld [vmem:[#allocation8 + $0xcc] sm:$0xff]
    %v1316 = vld [vmem:[#allocation8 + $0xd4] sm:$0xff]
    %v1317 = vld [vmem:[#allocation8 + $0xdc] sm:$0xf]
    %v1318 = vld [vmem:[#allocation8 + $0xe0] sm:$0xff]
    %v1319 = vld [vmem:[#allocation8 + $0xe8] sm:$0xff]
    %v1320 = vld [vmem:[#allocation8 + $0xf0] sm:$0xff]
    %v1321 = vld [vmem:[#allocation8 + $0xf8] sm:$0xf]
    %v1322 = vld [vmem:[#allocation8 + $0xfc] sm:$0xff]
    %v1323 = vld [vmem:[#allocation8 + $0x104] sm:$0xff]
    %v1324 = vld [vmem:[#allocation8 + $0x10c] sm:$0xff]
    %v1325 = vld [vmem:[#allocation8 + $0x114] sm:$0xf]
    %v1326 = vld [vmem:[#allocation8 + $0x118] sm:$0xff]
    %v1327 = vld [vmem:[#allocation8 + $0x120] sm:$0xff]
    %v1328 = vld [vmem:[#allocation8 + $0x128] sm:$0xff]
    %v1329 = vld [vmem:[#allocation8 + $0x130] sm:$0xf]
    %v1330 = vld [vmem:[#allocation8 + $0x134] sm:$0xff]
    %v1331 = vld [vmem:[#allocation8 + $0x13c] sm:$0xff]
    %v1332 = vld [vmem:[#allocation8 + $0x144] sm:$0xff]
    %v1333 = vld [vmem:[#allocation8 + $0x14c] sm:$0xf]
    %v1334 = vld [vmem:[#allocation8 + $0x150] sm:$0xff]
    %v1335 = vld [vmem:[#allocation8 + $0x158] sm:$0xff]
    %v1336 = vld [vmem:[#allocation8 + $0x160] sm:$0xff]
    %v1337 = vld [vmem:[#allocation8 + $0x168] sm:$0xf]
    %v1338 = vld [vmem:[#allocation8 + $0x16c] sm:$0xff]
    %v1339 = vld [vmem:[#allocation8 + $0x174] sm:$0xff]
    %v1340 = vld [vmem:[#allocation8 + $0x17c] sm:$0xff]
    %v1341 = vld [vmem:[#allocation8 + $0x184] sm:$0xf]
    %v1342 = vld [vmem:[#allocation8 + $0x188] sm:$0xff]
    %v1343 = vld [vmem:[#allocation8 + $0x190] sm:$0xff]
    %v1344 = vld [vmem:[#allocation8 + $0x198] sm:$0xff]
    %v1345 = vld [vmem:[#allocation8 + $0x1a0] sm:$0xf]
    %v1346 = vld [vmem:[#allocation8 + $0x1a4] sm:$0xff]
    %v1347 = vld [vmem:[#allocation8 + $0x1ac] sm:$0xff]
    %v1348 = vld [vmem:[#allocation8 + $0x1b4] sm:$0xff]
    %v1349 = vld [vmem:[#allocation8 + $0x1bc] sm:$0xf]
    %v1350 = vld [vmem:[%s6] sm:$0xff]
    %v1352 = vlaneseq
    %v1353 = vshrl.u32 %v1352, 7
    %v1354 = vsub.s32 0, %v1353
    %v1355 = vrot.slane %v1350, %v1354
    %v1356 = vlaneseq
    %v1357 = vshrl.u32 %v1356, 7
    %v1358 = vsub.s32 1, %v1357
    %v1359 = vrot.slane %v1350, %v1358
    %v1360 = vlaneseq
    %v1361 = vshrl.u32 %v1360, 7
    %v1362 = vsub.s32 2, %v1361
    %v1363 = vrot.slane %v1350, %v1362
    %v1364 = vlaneseq
    %v1365 = vshrl.u32 %v1364, 7
    %v1366 = vsub.s32 3, %v1365
    %v1367 = vrot.slane %v1350, %v1366
    %v1368 = vlaneseq
    %v1369 = vshrl.u32 %v1368, 7
    %v1370 = vsub.s32 4, %v1369
    %v1371 = vrot.slane %v1350, %v1370
    %v1372 = vlaneseq
    %v1373 = vshrl.u32 %v1372, 7
    %v1374 = vsub.s32 5, %v1373
    %v1375 = vrot.slane %v1350, %v1374
    %v1376 = vlaneseq
    %v1377 = vshrl.u32 %v1376, 7
    %v1378 = vsub.s32 6, %v1377
    %v1379 = vrot.slane %v1350, %v1378
    %v1451 = vunpack.c.l.b16 %v1286
    %v1452 = vunpack.c.h.b16 %v1286
    %v1453 = vunpack.c.l.b16 %v1287
    %v1454 = vunpack.c.h.b16 %v1287
    %v1455 = vunpack.c.l.b16 %v1288
    %v1456 = vunpack.c.h.b16 %v1288
    %v1457 = vunpack.c.l.b16 %v1289
    %v1458 = vunpack.c.l.b16 %v1290
    %v1459 = vunpack.c.h.b16 %v1290
    %v1460 = vunpack.c.l.b16 %v1291
    %v1461 = vunpack.c.h.b16 %v1291
    %v1462 = vunpack.c.l.b16 %v1292
    %v1463 = vunpack.c.h.b16 %v1292
    %v1464 = vunpack.c.l.b16 %v1293
    %v1465 = vunpack.c.l.b16 %v1294
    %v1466 = vunpack.c.h.b16 %v1294
    %v1467 = vunpack.c.l.b16 %v1295
    %v1468 = vunpack.c.h.b16 %v1295
    %v1469 = vunpack.c.l.b16 %v1296
    %v1470 = vunpack.c.h.b16 %v1296
    %v1471 = vunpack.c.l.b16 %v1297
    %v1472 = vunpack.c.l.b16 %v1298
    %v1473 = vunpack.c.h.b16 %v1298
    %v1474 = vunpack.c.l.b16 %v1299
    %v1475 = vunpack.c.h.b16 %v1299
    %v1476 = vunpack.c.l.b16 %v1300
    %v1477 = vunpack.c.h.b16 %v1300
    %v1478 = vunpack.c.l.b16 %v1301
    %v1479 = vunpack.c.l.b16 %v1302
    %v1480 = vunpack.c.h.b16 %v1302
    %v1481 = vunpack.c.l.b16 %v1303
    %v1482 = vunpack.c.h.b16 %v1303
    %v1483 = vunpack.c.l.b16 %v1304
    %v1484 = vunpack.c.h.b16 %v1304
    %v1485 = vunpack.c.l.b16 %v1305
    %v1486 = vunpack.c.l.b16 %v1306
    %v1487 = vunpack.c.h.b16 %v1306
    %v1488 = vunpack.c.l.b16 %v1307
    %v1489 = vunpack.c.h.b16 %v1307
    %v1490 = vunpack.c.l.b16 %v1308
    %v1491 = vunpack.c.h.b16 %v1308
    %v1492 = vunpack.c.l.b16 %v1309
    %v1493 = vunpack.c.l.b16 %v1310
    %v1494 = vunpack.c.h.b16 %v1310
    %v1495 = vunpack.c.l.b16 %v1311
    %v1496 = vunpack.c.h.b16 %v1311
    %v1497 = vunpack.c.l.b16 %v1312
    %v1498 = vunpack.c.h.b16 %v1312
    %v1499 = vunpack.c.l.b16 %v1313
    %v1500 = vunpack.c.l.b16 %v1314
    %v1501 = vunpack.c.h.b16 %v1314
    %v1502 = vunpack.c.l.b16 %v1315
    %v1503 = vunpack.c.h.b16 %v1315
    %v1504 = vunpack.c.l.b16 %v1316
    %v1505 = vunpack.c.h.b16 %v1316
    %v1506 = vunpack.c.l.b16 %v1317
    %v1507 = vunpack.c.l.b16 %v1318
    %v1508 = vunpack.c.h.b16 %v1318
    %v1509 = vunpack.c.l.b16 %v1319
    %v1510 = vunpack.c.h.b16 %v1319
    %v1511 = vunpack.c.l.b16 %v1320
    %v1512 = vunpack.c.h.b16 %v1320
    %v1513 = vunpack.c.l.b16 %v1321
    %v1514 = vunpack.c.l.b16 %v1322
    %v1515 = vunpack.c.h.b16 %v1322
    %v1516 = vunpack.c.l.b16 %v1323
    %v1517 = vunpack.c.h.b16 %v1323
    %v1518 = vunpack.c.l.b16 %v1324
    %v1519 = vunpack.c.h.b16 %v1324
    %v1520 = vunpack.c.l.b16 %v1325
    %v1521 = vunpack.c.l.b16 %v1326
    %v1522 = vunpack.c.h.b16 %v1326
    %v1523 = vunpack.c.l.b16 %v1327
    %v1524 = vunpack.c.h.b16 %v1327
    %v1525 = vunpack.c.l.b16 %v1328
    %v1526 = vunpack.c.h.b16 %v1328
    %v1527 = vunpack.c.l.b16 %v1329
    %v1528 = vunpack.c.l.b16 %v1330
    %v1529 = vunpack.c.h.b16 %v1330
    %v1530 = vunpack.c.l.b16 %v1331
    %v1531 = vunpack.c.h.b16 %v1331
    %v1532 = vunpack.c.l.b16 %v1332
    %v1533 = vunpack.c.h.b16 %v1332
    %v1534 = vunpack.c.l.b16 %v1333
    %v1535 = vunpack.c.l.b16 %v1334
    %v1536 = vunpack.c.h.b16 %v1334
    %v1537 = vunpack.c.l.b16 %v1335
    %v1538 = vunpack.c.h.b16 %v1335
    %v1539 = vunpack.c.l.b16 %v1336
    %v1540 = vunpack.c.h.b16 %v1336
    %v1541 = vunpack.c.l.b16 %v1337
    %v1542 = vunpack.c.l.b16 %v1338
    %v1543 = vunpack.c.h.b16 %v1338
    %v1544 = vunpack.c.l.b16 %v1339
    %v1545 = vunpack.c.h.b16 %v1339
    %v1546 = vunpack.c.l.b16 %v1340
    %v1547 = vunpack.c.h.b16 %v1340
    %v1548 = vunpack.c.l.b16 %v1341
    %v1549 = vunpack.c.l.b16 %v1342
    %v1550 = vunpack.c.h.b16 %v1342
    %v1551 = vunpack.c.l.b16 %v1343
    %v1552 = vunpack.c.h.b16 %v1343
    %v1553 = vunpack.c.l.b16 %v1344
    %v1554 = vunpack.c.h.b16 %v1344
    %v1555 = vunpack.c.l.b16 %v1345
    %v1556 = vunpack.c.l.b16 %v1346
    %v1557 = vunpack.c.h.b16 %v1346
    %v1558 = vunpack.c.l.b16 %v1347
    %v1559 = vunpack.c.h.b16 %v1347
    %v1560 = vunpack.c.l.b16 %v1348
    %v1561 = vunpack.c.h.b16 %v1348
    %v1562 = vunpack.c.l.b16 %v1349
    %v1563 = vpack.c.b16 %v1458, %v1451
    %v1564 = vpack.c.b16 %v1459, %v1452
    %v1565 = vpack.c.b16 %v1460, %v1453
    %v1566 = vpack.c.b16 %v1461, %v1454
    %v1567 = vpack.c.b16 %v1462, %v1455
    %v1568 = vpack.c.b16 %v1463, %v1456
    %v1569 = vpack.c.b16 %v1464, %v1457
    %v1570 = vpack.c.b16 %v1472, %v1465
    %v1571 = vpack.c.b16 %v1473, %v1466
    %v1572 = vpack.c.b16 %v1474, %v1467
    %v1573 = vpack.c.b16 %v1475, %v1468
    %v1574 = vpack.c.b16 %v1476, %v1469
    %v1575 = vpack.c.b16 %v1477, %v1470
    %v1576 = vpack.c.b16 %v1478, %v1471
    %v1577 = vpack.c.b16 %v1486, %v1479
    %v1578 = vpack.c.b16 %v1487, %v1480
    %v1579 = vpack.c.b16 %v1488, %v1481
    %v1580 = vpack.c.b16 %v1489, %v1482
    %v1581 = vpack.c.b16 %v1490, %v1483
    %v1582 = vpack.c.b16 %v1491, %v1484
    %v1583 = vpack.c.b16 %v1492, %v1485
    %v1584 = vpack.c.b16 %v1500, %v1493
    %v1585 = vpack.c.b16 %v1501, %v1494
    %v1586 = vpack.c.b16 %v1502, %v1495
    %v1587 = vpack.c.b16 %v1503, %v1496
    %v1588 = vpack.c.b16 %v1504, %v1497
    %v1589 = vpack.c.b16 %v1505, %v1498
    %v1590 = vpack.c.b16 %v1506, %v1499
    %v1591 = vpack.c.b16 %v1514, %v1507
    %v1592 = vpack.c.b16 %v1515, %v1508
    %v1593 = vpack.c.b16 %v1516, %v1509
    %v1594 = vpack.c.b16 %v1517, %v1510
    %v1595 = vpack.c.b16 %v1518, %v1511
    %v1596 = vpack.c.b16 %v1519, %v1512
    %v1597 = vpack.c.b16 %v1520, %v1513
    %v1598 = vpack.c.b16 %v1528, %v1521
    %v1599 = vpack.c.b16 %v1529, %v1522
    %v1600 = vpack.c.b16 %v1530, %v1523
    %v1601 = vpack.c.b16 %v1531, %v1524
    %v1602 = vpack.c.b16 %v1532, %v1525
    %v1603 = vpack.c.b16 %v1533, %v1526
    %v1604 = vpack.c.b16 %v1534, %v1527
    %v1605 = vpack.c.b16 %v1542, %v1535
    %v1606 = vpack.c.b16 %v1543, %v1536
    %v1607 = vpack.c.b16 %v1544, %v1537
    %v1608 = vpack.c.b16 %v1545, %v1538
    %v1609 = vpack.c.b16 %v1546, %v1539
    %v1610 = vpack.c.b16 %v1547, %v1540
    %v1611 = vpack.c.b16 %v1548, %v1541
    %v1612 = vpack.c.b16 %v1556, %v1549
    %v1613 = vpack.c.b16 %v1557, %v1550
    %v1614 = vpack.c.b16 %v1558, %v1551
    %v1615 = vpack.c.b16 %v1559, %v1552
    %v1616 = vpack.c.b16 %v1560, %v1553
    %v1617 = vpack.c.b16 %v1561, %v1554
    %v1618 = vpack.c.b16 %v1562, %v1555
    %1675 = vmatprep.subr.bf16.mxu0 %v1564
    %1676 = vmatpush1.bf16.msra.mxu0 %v1563
    %1677 = vmatprep.subr.bf16.mxu0 %v1571
    %1678 = vmatpush1.bf16.msra.mxu0 %v1570
    %1679 = vmatprep.subr.bf16.mxu0 %v1578
    %1680 = vmatpush1.bf16.msra.mxu0 %v1577
    %1681 = vmatprep.subr.bf16.mxu0 %v1585
    %1682 = vmatpush1.bf16.msra.mxu0 %v1584
    %1683 = vmatprep.subr.bf16.mxu0 %v1592
    %1684 = vmatpush1.bf16.msra.mxu0 %v1591
    %1685 = vmatprep.subr.bf16.mxu0 %v1599
    %1686 = vmatpush1.bf16.msra.mxu0 %v1598
    %1687 = vmatprep.subr.bf16.mxu0 %v1606
    %1688 = vmatpush1.bf16.msra.mxu0 %v1605
    %1689 = vmatprep.subr.bf16.mxu0 %v1613
    %1690 = vmatpush1.bf16.msra.mxu0 %v1612
    %1691 = vmatprep.subr.bf16.mxu0 0
    %1692 = vmatpush1.bf16.msra.mxu0 0
    %1693 = vmatprep.subr.bf16.mxu0 0
    %1694 = vmatpush1.bf16.msra.mxu0 0
    %1695 = vmatprep.subr.bf16.mxu0 0
    %1696 = vmatpush1.bf16.msra.mxu0 0
    %1697 = vmatprep.subr.bf16.mxu0 0
    %1698 = vmatpush1.bf16.msra.mxu0 0
    %1699 = vmatprep.subr.bf16.mxu0 0
    %1700 = vmatpush1.bf16.msra.mxu0 0
    %1701 = vmatprep.subr.bf16.mxu0 0
    %1702 = vmatpush1.bf16.msra.mxu0 0
    %1703 = vmatprep.subr.bf16.mxu0 0
    %1704 = vmatpush1.bf16.msra.mxu0 0
    %1705 = vmatprep.subr.bf16.mxu0 0
    %1706 = vmatpush1.bf16.msra.mxu0 0
    %1707 = vmatprep.mubr.bf16.mxu0 0
    %1708 = vmatmul.mubr.bf16.gmra.mrb[0].mxu0 %v1285
    %v1709 = vpop.f32.mrb[0].mxu0
    %v1710 = vadd.f32 %v1355, %v1709
    %v1711 = vpop.f32.mrb[0].mxu0
    %v1712 = vadd.f32 %v1359, %v1711
    %v1713 = vpop.f32.mrb[0].mxu0
    %v1714 = vpop.f32.mrb[0].mxu0
    %1715 = vdwg.mxu0
    %1716 = vmatprep.subr.bf16.mxu0 %v1566
    %1717 = vmatpush1.bf16.msra.mxu0 %v1565
    %1718 = vmatprep.subr.bf16.mxu0 %v1573
    %1719 = vmatpush1.bf16.msra.mxu0 %v1572
    %1720 = vmatprep.subr.bf16.mxu0 %v1580
    %1721 = vmatpush1.bf16.msra.mxu0 %v1579
    %1722 = vmatprep.subr.bf16.mxu0 %v1587
    %1723 = vmatpush1.bf16.msra.mxu0 %v1586
    %1724 = vmatprep.subr.bf16.mxu0 %v1594
    %1725 = vmatpush1.bf16.msra.mxu0 %v1593
    %1726 = vmatprep.subr.bf16.mxu0 %v1601
    %1727 = vmatpush1.bf16.msra.mxu0 %v1600
    %1728 = vmatprep.subr.bf16.mxu0 %v1608
    %1729 = vmatpush1.bf16.msra.mxu0 %v1607
    %1730 = vmatprep.subr.bf16.mxu0 %v1615
    %1731 = vmatpush1.bf16.msra.mxu0 %v1614
    %1732 = vmatprep.subr.bf16.mxu0 0
    %1733 = vmatpush1.bf16.msra.mxu0 0
    %1734 = vmatprep.subr.bf16.mxu0 0
    %1735 = vmatpush1.bf16.msra.mxu0 0
    %1736 = vmatprep.subr.bf16.mxu0 0
    %1737 = vmatpush1.bf16.msra.mxu0 0
    %1738 = vmatprep.subr.bf16.mxu0 0
    %1739 = vmatpush1.bf16.msra.mxu0 0
    %1740 = vmatprep.subr.bf16.mxu0 0
    %1741 = vmatpush1.bf16.msra.mxu0 0
    %1742 = vmatprep.subr.bf16.mxu0 0
    %1743 = vmatpush1.bf16.msra.mxu0 0
    %1744 = vmatprep.subr.bf16.mxu0 0
    %1745 = vmatpush1.bf16.msra.mxu0 0
    %1746 = vmatprep.subr.bf16.mxu0 0
    %1747 = vmatpush1.bf16.msra.mxu0 0
    %1748 = vmatprep.mubr.bf16.mxu0 0
    %1749 = vmatmul.mubr.bf16.gmra.mrb[0].mxu0 %v1285
    %v1750 = vpop.f32.mrb[0].mxu0
    %v1751 = vadd.f32 %v1363, %v1750
    %v1752 = vpop.f32.mrb[0].mxu0
    %v1753 = vadd.f32 %v1367, %v1752
    %v1754 = vpop.f32.mrb[0].mxu0
    %v1755 = vpop.f32.mrb[0].mxu0
    %1756 = vdwg.mxu0
    %1757 = vmatprep.subr.bf16.mxu0 %v1568
    %1758 = vmatpush1.bf16.msra.mxu0 %v1567
    %1759 = vmatprep.subr.bf16.mxu0 %v1575
    %1760 = vmatpush1.bf16.msra.mxu0 %v1574
    %1761 = vmatprep.subr.bf16.mxu0 %v1582
    %1762 = vmatpush1.bf16.msra.mxu0 %v1581
    %1763 = vmatprep.subr.bf16.mxu0 %v1589
    %1764 = vmatpush1.bf16.msra.mxu0 %v1588
    %1765 = vmatprep.subr.bf16.mxu0 %v1596
    %1766 = vmatpush1.bf16.msra.mxu0 %v1595
    %1767 = vmatprep.subr.bf16.mxu0 %v1603
    %1768 = vmatpush1.bf16.msra.mxu0 %v1602
    %1769 = vmatprep.subr.bf16.mxu0 %v1610
    %1770 = vmatpush1.bf16.msra.mxu0 %v1609
    %1771 = vmatprep.subr.bf16.mxu0 %v1617
    %1772 = vmatpush1.bf16.msra.mxu0 %v1616
    %1773 = vmatprep.subr.bf16.mxu0 0
    %1774 = vmatpush1.bf16.msra.mxu0 0
    %1775 = vmatprep.subr.bf16.mxu0 0
    %1776 = vmatpush1.bf16.msra.mxu0 0
    %1777 = vmatprep.subr.bf16.mxu0 0
    %1778 = vmatpush1.bf16.msra.mxu0 0
    %1779 = vmatprep.subr.bf16.mxu0 0
    %1780 = vmatpush1.bf16.msra.mxu0 0
    %1781 = vmatprep.subr.bf16.mxu0 0
    %1782 = vmatpush1.bf16.msra.mxu0 0
    %1783 = vmatprep.subr.bf16.mxu0 0
    %1784 = vmatpush1.bf16.msra.mxu0 0
    %1785 = vmatprep.subr.bf16.mxu0 0
    %1786 = vmatpush1.bf16.msra.mxu0 0
    %1787 = vmatprep.subr.bf16.mxu0 0
    %1788 = vmatpush1.bf16.msra.mxu0 0
    %1789 = vmatprep.mubr.bf16.mxu0 0
    %1790 = vmatmul.mubr.bf16.gmra.mrb[0].mxu0 %v1285
    %v1791 = vpop.f32.mrb[0].mxu0
    %v1792 = vadd.f32 %v1371, %v1791
    %v1793 = vpop.f32.mrb[0].mxu0
    %v1794 = vadd.f32 %v1375, %v1793
    %v1795 = vpop.f32.mrb[0].mxu0
    %v1796 = vpop.f32.mrb[0].mxu0
    %1797 = vdwg.mxu0
    %1798 = vmatprep.subr.bf16.mxu0 0
    %1799 = vmatpush1.bf16.msra.mxu0 %v1569
    %1800 = vmatprep.subr.bf16.mxu0 0
    %1801 = vmatpush1.bf16.msra.mxu0 %v1576
    %1802 = vmatprep.subr.bf16.mxu0 0
    %1803 = vmatpush1.bf16.msra.mxu0 %v1583
    %1804 = vmatprep.subr.bf16.mxu0 0
    %1805 = vmatpush1.bf16.msra.mxu0 %v1590
    %1806 = vmatprep.subr.bf16.mxu0 0
    %1807 = vmatpush1.bf16.msra.mxu0 %v1597
    %1808 = vmatprep.subr.bf16.mxu0 0
    %1809 = vmatpush1.bf16.msra.mxu0 %v1604
    %1810 = vmatprep.subr.bf16.mxu0 0
    %1811 = vmatpush1.bf16.msra.mxu0 %v1611
    %1812 = vmatprep.subr.bf16.mxu0 0
    %1813 = vmatpush1.bf16.msra.mxu0 %v1618
    %1814 = vmatprep.subr.bf16.mxu0 0
    %1815 = vmatpush1.bf16.msra.mxu0 0
    %1816 = vmatprep.subr.bf16.mxu0 0
    %1817 = vmatpush1.bf16.msra.mxu0 0
    %1818 = vmatprep.subr.bf16.mxu0 0
    %1819 = vmatpush1.bf16.msra.mxu0 0
    %1820 = vmatprep.subr.bf16.mxu0 0
    %1821 = vmatpush1.bf16.msra.mxu0 0
    %1822 = vmatprep.subr.bf16.mxu0 0
    %1823 = vmatpush1.bf16.msra.mxu0 0
    %1824 = vmatprep.subr.bf16.mxu0 0
    %1825 = vmatpush1.bf16.msra.mxu0 0
    %1826 = vmatprep.subr.bf16.mxu0 0
    %1827 = vmatpush1.bf16.msra.mxu0 0
    %1828 = vmatprep.subr.bf16.mxu0 0
    %1829 = vmatpush1.bf16.msra.mxu0 0
    %1830 = vmatprep.mubr.bf16.mxu0 0
    %1831 = vmatmul.mubr.bf16.gmra.mrb[0].mxu0 %v1285
    %v1832 = vpop.f32.mrb[0].mxu0
    %v1833 = vadd.f32 %v1379, %v1832
    %v1834 = vpop.f32.mrb[0].mxu0
    %v1835 = vpop.f32.mrb[0].mxu0
    %v1836 = vpop.f32.mrb[0].mxu0
    %1837 = vdwg.mxu0
    %v1838 = vtanh.pop %v1710
    %v1839 = vtanh.pop %v1712
    %v1840 = vtanh.pop %v1751
    %v1841 = vtanh.pop %v1753
    %v1842 = vtanh.pop %v1792
    %v1843 = vtanh.pop %v1794
    %v1844 = vtanh.pop %v1833
    %v1845 = vpack.c.bf16 %v1838, %v1838
    %v1846 = vpack.c.bf16 %v1839, %v1839
    %v1847 = vpack.c.bf16 %v1840, %v1840
    %v1848 = vpack.c.bf16 %v1841, %v1841
    %v1849 = vpack.c.bf16 %v1842, %v1842
    %v1850 = vpack.c.bf16 %v1843, %v1843
    %v1851 = vpack.c.bf16 %v1844, %v1844
    %v1852 = vld [vmem:[#allocation10] sm:$0xf]
    %v1853 = vld [vmem:[#allocation10 + $0x4] sm:$0xf]
    %v1854 = vld [vmem:[#allocation10 + $0x8] sm:$0xf]
    %v1855 = vld [vmem:[#allocation10 + $0xc] sm:$0xf]
    %v1856 = vld [vmem:[#allocation10 + $0x10] sm:$0xf]
    %v1857 = vld [vmem:[#allocation10 + $0x14] sm:$0xf]
    %v1858 = vld [vmem:[#allocation10 + $0x18] sm:$0xf]
    %v1859 = vld [vmem:[#allocation10 + $0x1c] sm:$0xf]
    %v1860 = vld [vmem:[#allocation10 + $0x20] sm:$0xf]
    %v1861 = vld [vmem:[#allocation10 + $0x24] sm:$0xf]
    %v1862 = vld [vmem:[#allocation10 + $0x28] sm:$0xf]
    %v1863 = vld [vmem:[#allocation10 + $0x2c] sm:$0xf]
    %v1864 = vld [vmem:[#allocation10 + $0x30] sm:$0xf]
    %v1865 = vld [vmem:[#allocation10 + $0x34] sm:$0xf]
    %v1866 = vld [vmem:[#allocation10 + $0x38] sm:$0xf]
    %v1867 = vld [vmem:[#allocation10 + $0x3c] sm:$0xf]
    %v1868 = vld [vmem:[#allocation10 + $0x40] sm:$0xf]
    %v1869 = vld [vmem:[#allocation10 + $0x44] sm:$0xf]
    %v1870 = vld [vmem:[#allocation10 + $0x48] sm:$0xf]
    %v1871 = vld [vmem:[#allocation10 + $0x4c] sm:$0xf]
    %v1872 = vld [vmem:[#allocation10 + $0x50] sm:$0xf]
    %v1873 = vld [vmem:[#allocation10 + $0x54] sm:$0xf]
    %v1874 = vld [vmem:[#allocation10 + $0x58] sm:$0xf]
    %v1875 = vld [vmem:[#allocation10 + $0x5c] sm:$0xf]
    %v1876 = vld [vmem:[#allocation10 + $0x60] sm:$0xf]
    %v1877 = vld [vmem:[#allocation10 + $0x64] sm:$0xf]
    %v1878 = vld [vmem:[#allocation10 + $0x68] sm:$0xf]
    %v1879 = vld [vmem:[#allocation10 + $0x6c] sm:$0xf]
    %v1880 = vld [vmem:[#allocation10 + $0x70] sm:$0xf]
    %v1881 = vld [vmem:[#allocation10 + $0x74] sm:$0xf]
    %v1882 = vld [vmem:[#allocation10 + $0x78] sm:$0xf]
    %v1883 = vld [vmem:[#allocation10 + $0x7c] sm:$0xf]
    %v1884 = vld [vmem:[#allocation10 + $0x80] sm:$0xf]
    %v1885 = vld [vmem:[#allocation10 + $0x84] sm:$0xf]
    %v1886 = vld [vmem:[#allocation10 + $0x88] sm:$0xf]
    %v1887 = vld [vmem:[#allocation10 + $0x8c] sm:$0xf]
    %v1888 = vld [vmem:[#allocation10 + $0x90] sm:$0xf]
    %v1889 = vld [vmem:[#allocation10 + $0x94] sm:$0xf]
    %v1890 = vld [vmem:[#allocation10 + $0x98] sm:$0xf]
    %v1891 = vld [vmem:[#allocation10 + $0x9c] sm:$0xf]
    %v1892 = vld [vmem:[#allocation10 + $0xa0] sm:$0xf]
    %v1893 = vld [vmem:[#allocation10 + $0xa4] sm:$0xf]
    %v1894 = vld [vmem:[#allocation10 + $0xa8] sm:$0xf]
    %v1895 = vld [vmem:[#allocation10 + $0xac] sm:$0xf]
    %v1896 = vld [vmem:[#allocation10 + $0xb0] sm:$0xf]
    %v1897 = vld [vmem:[#allocation10 + $0xb4] sm:$0xf]
    %v1898 = vld [vmem:[#allocation10 + $0xb8] sm:$0xf]
    %v1899 = vld [vmem:[#allocation10 + $0xbc] sm:$0xf]
    %v1900 = vld [vmem:[#allocation10 + $0xc0] sm:$0xf]
    %v1901 = vld [vmem:[#allocation10 + $0xc4] sm:$0xf]
    %v1902 = vld [vmem:[#allocation10 + $0xc8] sm:$0xf]
    %v1903 = vld [vmem:[#allocation10 + $0xcc] sm:$0xf]
    %v1904 = vld [vmem:[#allocation10 + $0xd0] sm:$0xf]
    %v1905 = vld [vmem:[#allocation10 + $0xd4] sm:$0xf]
    %v1906 = vld [vmem:[#allocation10 + $0xd8] sm:$0xf]
    %v1907 = vld [vmem:[#allocation10 + $0xdc] sm:$0xf]
    %v1908 = vld [vmem:[#allocation10 + $0xe0] sm:$0xf]
    %v1909 = vld [vmem:[#allocation10 + $0xe4] sm:$0xf]
    %v1910 = vld [vmem:[#allocation10 + $0xe8] sm:$0xf]
    %v1911 = vld [vmem:[#allocation10 + $0xec] sm:$0xf]
    %v1912 = vld [vmem:[#allocation10 + $0xf0] sm:$0xf]
    %v1913 = vld [vmem:[#allocation10 + $0xf4] sm:$0xf]
    %v1914 = vld [vmem:[#allocation10 + $0xf8] sm:$0xf]
    %v1915 = vld [vmem:[#allocation10 + $0xfc] sm:$0xf]
    %v1916 = vld [vmem:[#allocation10 + $0x100] sm:$0xf]
    %v1917 = vld [vmem:[#allocation10 + $0x104] sm:$0xf]
    %v1918 = vld [vmem:[#allocation10 + $0x108] sm:$0xf]
    %v1919 = vld [vmem:[#allocation10 + $0x10c] sm:$0xf]
    %v1920 = vld [vmem:[#allocation10 + $0x110] sm:$0xf]
    %v1921 = vld [vmem:[#allocation10 + $0x114] sm:$0xf]
    %v1922 = vld [vmem:[#allocation10 + $0x118] sm:$0xf]
    %v1923 = vld [vmem:[#allocation10 + $0x11c] sm:$0xf]
    %v1924 = vld [vmem:[#allocation10 + $0x120] sm:$0xf]
    %v1925 = vld [vmem:[#allocation10 + $0x124] sm:$0xf]
    %v1926 = vld [vmem:[#allocation10 + $0x128] sm:$0xf]
    %v1927 = vld [vmem:[#allocation10 + $0x12c] sm:$0xf]
    %v1928 = vld [vmem:[#allocation10 + $0x130] sm:$0xf]
    %v1929 = vld [vmem:[#allocation10 + $0x134] sm:$0xf]
    %v1930 = vld [vmem:[#allocation10 + $0x138] sm:$0xf]
    %v1931 = vld [vmem:[#allocation10 + $0x13c] sm:$0xf]
    %v1932 = vld [vmem:[#allocation10 + $0x140] sm:$0xf]
    %v1933 = vld [vmem:[#allocation10 + $0x144] sm:$0xf]
    %v1934 = vld [vmem:[#allocation10 + $0x148] sm:$0xf]
    %v1935 = vld [vmem:[#allocation10 + $0x14c] sm:$0xf]
    %v1936 = vld [vmem:[#allocation10 + $0x150] sm:$0xf]
    %v1937 = vld [vmem:[#allocation10 + $0x154] sm:$0xf]
    %v1938 = vld [vmem:[#allocation10 + $0x158] sm:$0xf]
    %v1939 = vld [vmem:[#allocation10 + $0x15c] sm:$0xf]
    %v1940 = vld [vmem:[#allocation10 + $0x160] sm:$0xf]
    %v1941 = vld [vmem:[#allocation10 + $0x164] sm:$0xf]
    %v1942 = vld [vmem:[#allocation10 + $0x168] sm:$0xf]
    %v1943 = vld [vmem:[#allocation10 + $0x16c] sm:$0xf]
    %v1944 = vld [vmem:[#allocation10 + $0x170] sm:$0xf]
    %v1945 = vld [vmem:[#allocation10 + $0x174] sm:$0xf]
    %v1946 = vld [vmem:[#allocation10 + $0x178] sm:$0xf]
    %v1947 = vld [vmem:[#allocation10 + $0x17c] sm:$0xf]
    %v1948 = vld [vmem:[#allocation10 + $0x180] sm:$0xf]
    %v1949 = vld [vmem:[#allocation10 + $0x184] sm:$0xf]
    %v1950 = vld [vmem:[#allocation10 + $0x188] sm:$0xf]
    %v1951 = vld [vmem:[#allocation10 + $0x18c] sm:$0xf]
    %v1952 = vld [vmem:[#allocation10 + $0x190] sm:$0xf]
    %v1953 = vld [vmem:[#allocation10 + $0x194] sm:$0xf]
    %v1954 = vld [vmem:[#allocation10 + $0x198] sm:$0xf]
    %v1955 = vld [vmem:[#allocation10 + $0x19c] sm:$0xf]
    %v1956 = vld [vmem:[#allocation10 + $0x1a0] sm:$0xf]
    %v1957 = vld [vmem:[#allocation10 + $0x1a4] sm:$0xf]
    %v1958 = vld [vmem:[#allocation10 + $0x1a8] sm:$0xf]
    %v1959 = vld [vmem:[#allocation10 + $0x1ac] sm:$0xf]
    %v1960 = vld [vmem:[#allocation10 + $0x1b0] sm:$0xf]
    %v1961 = vld [vmem:[#allocation10 + $0x1b4] sm:$0xf]
    %v1962 = vld [vmem:[#allocation10 + $0x1b8] sm:$0xf]
    %v1963 = vld [vmem:[#allocation10 + $0x1bc] sm:$0xf]
    %v1964 = vld [vmem:[%s8] sm:$0x1]
    %v1966 = vlaneseq
    %v1967 = vshrl.u32 %v1966, 7
    %v1968 = vsub.s32 0, %v1967
    %v1969 = vrot.slane %v1964, %v1968
    %v2083 = vunpack.c.l.b16 %v1852
    %v2084 = vunpack.c.l.b16 %v1853
    %v2085 = vunpack.c.l.b16 %v1854
    %v2086 = vunpack.c.l.b16 %v1855
    %v2087 = vunpack.c.l.b16 %v1856
    %v2088 = vunpack.c.l.b16 %v1857
    %v2089 = vunpack.c.l.b16 %v1858
    %v2090 = vunpack.c.l.b16 %v1859
    %v2091 = vunpack.c.l.b16 %v1860
    %v2092 = vunpack.c.l.b16 %v1861
    %v2093 = vunpack.c.l.b16 %v1862
    %v2094 = vunpack.c.l.b16 %v1863
    %v2095 = vunpack.c.l.b16 %v1864
    %v2096 = vunpack.c.l.b16 %v1865
    %v2097 = vunpack.c.l.b16 %v1866
    %v2098 = vunpack.c.l.b16 %v1867
    %v2099 = vunpack.c.l.b16 %v1868
    %v2100 = vunpack.c.l.b16 %v1869
    %v2101 = vunpack.c.l.b16 %v1870
    %v2102 = vunpack.c.l.b16 %v1871
    %v2103 = vunpack.c.l.b16 %v1872
    %v2104 = vunpack.c.l.b16 %v1873
    %v2105 = vunpack.c.l.b16 %v1874
    %v2106 = vunpack.c.l.b16 %v1875
    %v2107 = vunpack.c.l.b16 %v1876
    %v2108 = vunpack.c.l.b16 %v1877
    %v2109 = vunpack.c.l.b16 %v1878
    %v2110 = vunpack.c.l.b16 %v1879
    %v2111 = vunpack.c.l.b16 %v1880
    %v2112 = vunpack.c.l.b16 %v1881
    %v2113 = vunpack.c.l.b16 %v1882
    %v2114 = vunpack.c.l.b16 %v1883
    %v2115 = vunpack.c.l.b16 %v1884
    %v2116 = vunpack.c.l.b16 %v1885
    %v2117 = vunpack.c.l.b16 %v1886
    %v2118 = vunpack.c.l.b16 %v1887
    %v2119 = vunpack.c.l.b16 %v1888
    %v2120 = vunpack.c.l.b16 %v1889
    %v2121 = vunpack.c.l.b16 %v1890
    %v2122 = vunpack.c.l.b16 %v1891
    %v2123 = vunpack.c.l.b16 %v1892
    %v2124 = vunpack.c.l.b16 %v1893
    %v2125 = vunpack.c.l.b16 %v1894
    %v2126 = vunpack.c.l.b16 %v1895
    %v2127 = vunpack.c.l.b16 %v1896
    %v2128 = vunpack.c.l.b16 %v1897
    %v2129 = vunpack.c.l.b16 %v1898
    %v2130 = vunpack.c.l.b16 %v1899
    %v2131 = vunpack.c.l.b16 %v1900
    %v2132 = vunpack.c.l.b16 %v1901
    %v2133 = vunpack.c.l.b16 %v1902
    %v2134 = vunpack.c.l.b16 %v1903
    %v2135 = vunpack.c.l.b16 %v1904
    %v2136 = vunpack.c.l.b16 %v1905
    %v2137 = vunpack.c.l.b16 %v1906
    %v2138 = vunpack.c.l.b16 %v1907
    %v2139 = vunpack.c.l.b16 %v1908
    %v2140 = vunpack.c.l.b16 %v1909
    %v2141 = vunpack.c.l.b16 %v1910
    %v2142 = vunpack.c.l.b16 %v1911
    %v2143 = vunpack.c.l.b16 %v1912
    %v2144 = vunpack.c.l.b16 %v1913
    %v2145 = vunpack.c.l.b16 %v1914
    %v2146 = vunpack.c.l.b16 %v1915
    %v2147 = vunpack.c.l.b16 %v1916
    %v2148 = vunpack.c.l.b16 %v1917
    %v2149 = vunpack.c.l.b16 %v1918
    %v2150 = vunpack.c.l.b16 %v1919
    %v2151 = vunpack.c.l.b16 %v1920
    %v2152 = vunpack.c.l.b16 %v1921
    %v2153 = vunpack.c.l.b16 %v1922
    %v2154 = vunpack.c.l.b16 %v1923
    %v2155 = vunpack.c.l.b16 %v1924
    %v2156 = vunpack.c.l.b16 %v1925
    %v2157 = vunpack.c.l.b16 %v1926
    %v2158 = vunpack.c.l.b16 %v1927
    %v2159 = vunpack.c.l.b16 %v1928
    %v2160 = vunpack.c.l.b16 %v1929
    %v2161 = vunpack.c.l.b16 %v1930
    %v2162 = vunpack.c.l.b16 %v1931
    %v2163 = vunpack.c.l.b16 %v1932
    %v2164 = vunpack.c.l.b16 %v1933
    %v2165 = vunpack.c.l.b16 %v1934
    %v2166 = vunpack.c.l.b16 %v1935
    %v2167 = vunpack.c.l.b16 %v1936
    %v2168 = vunpack.c.l.b16 %v1937
    %v2169 = vunpack.c.l.b16 %v1938
    %v2170 = vunpack.c.l.b16 %v1939
    %v2171 = vunpack.c.l.b16 %v1940
    %v2172 = vunpack.c.l.b16 %v1941
    %v2173 = vunpack.c.l.b16 %v1942
    %v2174 = vunpack.c.l.b16 %v1943
    %v2175 = vunpack.c.l.b16 %v1944
    %v2176 = vunpack.c.l.b16 %v1945
    %v2177 = vunpack.c.l.b16 %v1946
    %v2178 = vunpack.c.l.b16 %v1947
    %v2179 = vunpack.c.l.b16 %v1948
    %v2180 = vunpack.c.l.b16 %v1949
    %v2181 = vunpack.c.l.b16 %v1950
    %v2182 = vunpack.c.l.b16 %v1951
    %v2183 = vunpack.c.l.b16 %v1952
    %v2184 = vunpack.c.l.b16 %v1953
    %v2185 = vunpack.c.l.b16 %v1954
    %v2186 = vunpack.c.l.b16 %v1955
    %v2187 = vunpack.c.l.b16 %v1956
    %v2188 = vunpack.c.l.b16 %v1957
    %v2189 = vunpack.c.l.b16 %v1958
    %v2190 = vunpack.c.l.b16 %v1959
    %v2191 = vunpack.c.l.b16 %v1960
    %v2192 = vunpack.c.l.b16 %v1961
    %v2193 = vunpack.c.l.b16 %v1962
    %v2194 = vunpack.c.l.b16 %v1963
    %v2195 = vpack.c.b16 %v2084, %v2083
    %v2196 = vpack.c.b16 %v2086, %v2085
    %v2197 = vpack.c.b16 %v2088, %v2087
    %v2198 = vpack.c.b16 %v2090, %v2089
    %v2199 = vpack.c.b16 %v2092, %v2091
    %v2200 = vpack.c.b16 %v2094, %v2093
    %v2201 = vpack.c.b16 %v2096, %v2095
    %v2202 = vpack.c.b16 %v2098, %v2097
    %v2203 = vpack.c.b16 %v2100, %v2099
    %v2204 = vpack.c.b16 %v2102, %v2101
    %v2205 = vpack.c.b16 %v2104, %v2103
    %v2206 = vpack.c.b16 %v2106, %v2105
    %v2207 = vpack.c.b16 %v2108, %v2107
    %v2208 = vpack.c.b16 %v2110, %v2109
    %v2209 = vpack.c.b16 %v2112, %v2111
    %v2210 = vpack.c.b16 %v2114, %v2113
    %v2211 = vpack.c.b16 %v2116, %v2115
    %v2212 = vpack.c.b16 %v2118, %v2117
    %v2213 = vpack.c.b16 %v2120, %v2119
    %v2214 = vpack.c.b16 %v2122, %v2121
    %v2215 = vpack.c.b16 %v2124, %v2123
    %v2216 = vpack.c.b16 %v2126, %v2125
    %v2217 = vpack.c.b16 %v2128, %v2127
    %v2218 = vpack.c.b16 %v2130, %v2129
    %v2219 = vpack.c.b16 %v2132, %v2131
    %v2220 = vpack.c.b16 %v2134, %v2133
    %v2221 = vpack.c.b16 %v2136, %v2135
    %v2222 = vpack.c.b16 %v2138, %v2137
    %v2223 = vpack.c.b16 %v2140, %v2139
    %v2224 = vpack.c.b16 %v2142, %v2141
    %v2225 = vpack.c.b16 %v2144, %v2143
    %v2226 = vpack.c.b16 %v2146, %v2145
    %v2227 = vpack.c.b16 %v2148, %v2147
    %v2228 = vpack.c.b16 %v2150, %v2149
    %v2229 = vpack.c.b16 %v2152, %v2151
    %v2230 = vpack.c.b16 %v2154, %v2153
    %v2231 = vpack.c.b16 %v2156, %v2155
    %v2232 = vpack.c.b16 %v2158, %v2157
    %v2233 = vpack.c.b16 %v2160, %v2159
    %v2234 = vpack.c.b16 %v2162, %v2161
    %v2235 = vpack.c.b16 %v2164, %v2163
    %v2236 = vpack.c.b16 %v2166, %v2165
    %v2237 = vpack.c.b16 %v2168, %v2167
    %v2238 = vpack.c.b16 %v2170, %v2169
    %v2239 = vpack.c.b16 %v2172, %v2171
    %v2240 = vpack.c.b16 %v2174, %v2173
    %v2241 = vpack.c.b16 %v2176, %v2175
    %v2242 = vpack.c.b16 %v2178, %v2177
    %v2243 = vpack.c.b16 %v2180, %v2179
    %v2244 = vpack.c.b16 %v2182, %v2181
    %v2245 = vpack.c.b16 %v2184, %v2183
    %v2246 = vpack.c.b16 %v2186, %v2185
    %v2247 = vpack.c.b16 %v2188, %v2187
    %v2248 = vpack.c.b16 %v2190, %v2189
    %v2249 = vpack.c.b16 %v2192, %v2191
    %v2250 = vpack.c.b16 %v2194, %v2193
    %2307 = vmatprep.subr.bf16.mxu0 0
    %2308 = vmatpush1.bf16.msra.mxu0 %v2195
    %2309 = vmatprep.subr.bf16.mxu0 0
    %2310 = vmatpush1.bf16.msra.mxu0 %v2196
    %2311 = vmatprep.subr.bf16.mxu0 0
    %2312 = vmatpush1.bf16.msra.mxu0 %v2197
    %2313 = vmatprep.subr.bf16.mxu0 0
    %2314 = vmatpush1.bf16.msra.mxu0 %v2198
    %2315 = vmatprep.subr.bf16.mxu0 0
    %2316 = vmatpush1.bf16.msra.mxu0 %v2199
    %2317 = vmatprep.subr.bf16.mxu0 0
    %2318 = vmatpush1.bf16.msra.mxu0 %v2200
    %2319 = vmatprep.subr.bf16.mxu0 0
    %2320 = vmatpush1.bf16.msra.mxu0 %v2201
    %2321 = vmatprep.subr.bf16.mxu0 0
    %2322 = vmatpush1.bf16.msra.mxu0 %v2202
    %2323 = vmatprep.subr.bf16.mxu0 0
    %2324 = vmatpush1.bf16.msra.mxu0 %v2203
    %2325 = vmatprep.subr.bf16.mxu0 0
    %2326 = vmatpush1.bf16.msra.mxu0 %v2204
    %2327 = vmatprep.subr.bf16.mxu0 0
    %2328 = vmatpush1.bf16.msra.mxu0 %v2205
    %2329 = vmatprep.subr.bf16.mxu0 0
    %2330 = vmatpush1.bf16.msra.mxu0 %v2206
    %2331 = vmatprep.subr.bf16.mxu0 0
    %2332 = vmatpush1.bf16.msra.mxu0 %v2207
    %2333 = vmatprep.subr.bf16.mxu0 0
    %2334 = vmatpush1.bf16.msra.mxu0 %v2208
    %2335 = vmatprep.subr.bf16.mxu0 0
    %2336 = vmatpush1.bf16.msra.mxu0 %v2209
    %2337 = vmatprep.subr.bf16.mxu0 0
    %2338 = vmatpush1.bf16.msra.mxu0 %v2210
    %2339 = vmatprep.mubr.bf16.mxu0 %v1846
    %2340 = vmatmul.mubr.bf16.gmra.mrb[0].mxu0 %v1845
    %v2341 = vpop.f32.mrb[0].mxu0
    %v2342 = vadd.f32 %v1969, %v2341
    %v2343 = vpop.f32.mrb[0].mxu0
    %v2344 = vpop.f32.mrb[0].mxu0
    %v2345 = vpop.f32.mrb[0].mxu0
    %2346 = vdwg.mxu0
    %2347 = vmatprep.subr.bf16.mxu0 0
    %2348 = vmatpush1.bf16.msra.mxu0 %v2211
    %2349 = vmatprep.subr.bf16.mxu0 0
    %2350 = vmatpush1.bf16.msra.mxu0 %v2212
    %2351 = vmatprep.subr.bf16.mxu0 0
    %2352 = vmatpush1.bf16.msra.mxu0 %v2213
    %2353 = vmatprep.subr.bf16.mxu0 0
    %2354 = vmatpush1.bf16.msra.mxu0 %v2214
    %2355 = vmatprep.subr.bf16.mxu0 0
    %2356 = vmatpush1.bf16.msra.mxu0 %v2215
    %2357 = vmatprep.subr.bf16.mxu0 0
    %2358 = vmatpush1.bf16.msra.mxu0 %v2216
    %2359 = vmatprep.subr.bf16.mxu0 0
    %2360 = vmatpush1.bf16.msra.mxu0 %v2217
    %2361 = vmatprep.subr.bf16.mxu0 0
    %2362 = vmatpush1.bf16.msra.mxu0 %v2218
    %2363 = vmatprep.subr.bf16.mxu0 0
    %2364 = vmatpush1.bf16.msra.mxu0 %v2219
    %2365 = vmatprep.subr.bf16.mxu0 0
    %2366 = vmatpush1.bf16.msra.mxu0 %v2220
    %2367 = vmatprep.subr.bf16.mxu0 0
    %2368 = vmatpush1.bf16.msra.mxu0 %v2221
    %2369 = vmatprep.subr.bf16.mxu0 0
    %2370 = vmatpush1.bf16.msra.mxu0 %v2222
    %2371 = vmatprep.subr.bf16.mxu0 0
    %2372 = vmatpush1.bf16.msra.mxu0 %v2223
    %2373 = vmatprep.subr.bf16.mxu0 0
    %2374 = vmatpush1.bf16.msra.mxu0 %v2224
    %2375 = vmatprep.subr.bf16.mxu0 0
    %2376 = vmatpush1.bf16.msra.mxu0 %v2225
    %2377 = vmatprep.subr.bf16.mxu0 0
    %2378 = vmatpush1.bf16.msra.mxu0 %v2226
    %2379 = vmatprep.mubr.bf16.mxu0 %v1848
    %2380 = vmatmul.mubr.bf16.gmra.mrb[0].mxu0 %v1847
    %v2381 = vpop.f32.mrb[0].mxu0
    %v2382 = vadd.f32 %v2342, %v2381
    %v2383 = vpop.f32.mrb[0].mxu0
    %v2384 = vpop.f32.mrb[0].mxu0
    %v2385 = vpop.f32.mrb[0].mxu0
    %2386 = vdwg.mxu0
    %2387 = vmatprep.subr.bf16.mxu0 0
    %2388 = vmatpush1.bf16.msra.mxu0 %v2227
    %2389 = vmatprep.subr.bf16.mxu0 0
    %2390 = vmatpush1.bf16.msra.mxu0 %v2228
    %2391 = vmatprep.subr.bf16.mxu0 0
    %2392 = vmatpush1.bf16.msra.mxu0 %v2229
    %2393 = vmatprep.subr.bf16.mxu0 0
    %2394 = vmatpush1.bf16.msra.mxu0 %v2230
    %2395 = vmatprep.subr.bf16.mxu0 0
    %2396 = vmatpush1.bf16.msra.mxu0 %v2231
    %2397 = vmatprep.subr.bf16.mxu0 0
    %2398 = vmatpush1.bf16.msra.mxu0 %v2232
    %2399 = vmatprep.subr.bf16.mxu0 0
    %2400 = vmatpush1.bf16.msra.mxu0 %v2233
    %2401 = vmatprep.subr.bf16.mxu0 0
    %2402 = vmatpush1.bf16.msra.mxu0 %v2234
    %2403 = vmatprep.subr.bf16.mxu0 0
    %2404 = vmatpush1.bf16.msra.mxu0 %v2235
    %2405 = vmatprep.subr.bf16.mxu0 0
    %2406 = vmatpush1.bf16.msra.mxu0 %v2236
    %2407 = vmatprep.subr.bf16.mxu0 0
    %2408 = vmatpush1.bf16.msra.mxu0 %v2237
    %2409 = vmatprep.subr.bf16.mxu0 0
    %2410 = vmatpush1.bf16.msra.mxu0 %v2238
    %2411 = vmatprep.subr.bf16.mxu0 0
    %2412 = vmatpush1.bf16.msra.mxu0 %v2239
    %2413 = vmatprep.subr.bf16.mxu0 0
    %2414 = vmatpush1.bf16.msra.mxu0 %v2240
    %2415 = vmatprep.subr.bf16.mxu0 0
    %2416 = vmatpush1.bf16.msra.mxu0 %v2241
    %2417 = vmatprep.subr.bf16.mxu0 0
    %2418 = vmatpush1.bf16.msra.mxu0 %v2242
    %2419 = vmatprep.mubr.bf16.mxu0 %v1850
    %2420 = vmatmul.mubr.bf16.gmra.mrb[0].mxu0 %v1849
    %v2421 = vpop.f32.mrb[0].mxu0
    %v2422 = vadd.f32 %v2382, %v2421
    %v2423 = vpop.f32.mrb[0].mxu0
    %v2424 = vpop.f32.mrb[0].mxu0
    %v2425 = vpop.f32.mrb[0].mxu0
    %2426 = vdwg.mxu0
    %2427 = vmatprep.subr.bf16.mxu0 0
    %2428 = vmatpush1.bf16.msra.mxu0 %v2243
    %2429 = vmatprep.subr.bf16.mxu0 0
    %2430 = vmatpush1.bf16.msra.mxu0 %v2244
    %2431 = vmatprep.subr.bf16.mxu0 0
    %2432 = vmatpush1.bf16.msra.mxu0 %v2245
    %2433 = vmatprep.subr.bf16.mxu0 0
    %2434 = vmatpush1.bf16.msra.mxu0 %v2246
    %2435 = vmatprep.subr.bf16.mxu0 0
    %2436 = vmatpush1.bf16.msra.mxu0 %v2247
    %2437 = vmatprep.subr.bf16.mxu0 0
    %2438 = vmatpush1.bf16.msra.mxu0 %v2248
    %2439 = vmatprep.subr.bf16.mxu0 0
    %2440 = vmatpush1.bf16.msra.mxu0 %v2249
    %2441 = vmatprep.subr.bf16.mxu0 0
    %2442 = vmatpush1.bf16.msra.mxu0 %v2250
    %2443 = vmatprep.subr.bf16.mxu0 0
    %2444 = vmatpush1.bf16.msra.mxu0 0
    %2445 = vmatprep.subr.bf16.mxu0 0
    %2446 = vmatpush1.bf16.msra.mxu0 0
    %2447 = vmatprep.subr.bf16.mxu0 0
    %2448 = vmatpush1.bf16.msra.mxu0 0
    %2449 = vmatprep.subr.bf16.mxu0 0
    %2450 = vmatpush1.bf16.msra.mxu0 0
    %2451 = vmatprep.subr.bf16.mxu0 0
    %2452 = vmatpush1.bf16.msra.mxu0 0
    %2453 = vmatprep.subr.bf16.mxu0 0
    %2454 = vmatpush1.bf16.msra.mxu0 0
    %2455 = vmatprep.subr.bf16.mxu0 0
    %2456 = vmatpush1.bf16.msra.mxu0 0
    %2457 = vmatprep.subr.bf16.mxu0 0
    %2458 = vmatpush1.bf16.msra.mxu0 0
    %2459 = vmatprep.mubr.bf16.mxu0 0
    %2460 = vmatmul.mubr.bf16.gmra.mrb[0].mxu0 %v1851
    %v2461 = vpop.f32.mrb[0].mxu0
    %v2462 = vadd.f32 %v2422, %v2461
    %v2463 = vpop.f32.mrb[0].mxu0
    %v2464 = vpop.f32.mrb[0].mxu0
    %v2465 = vpop.f32.mrb[0].mxu0
    %2466 = vdwg.mxu0
    %v2467 = vxor.u32 %v2462, 2147483648
    %v2468 = vmul.f32 %v2467, 1.442695
    %v2469 = vpow.pop %v2468
    %v2470 = vadd.f32 %v2469, 1.0
    %v2471 = vrcp.pop %v2470
    %v2472 = vmul.f32 1.0, %v2471
    %v2473 = vxor.u32 %v1280, 2147483648
    %v2474 = vmul.f32 %v2473, 1.442695
    %v2475 = vpow.pop %v2474
    %v2476 = vadd.f32 %v2475, 1.0
    %v2477 = vrcp.pop %v2476
    %v2478 = vmul.f32 1.0, %v2477
    %2479 = vst [vmem:[#allocation11] sm:$0xff] %v2478
    %2480 = vst [vmem:[#allocation12] sm:$0xff] %v2472
    // Predicated region
    $region58: #{tpu_custom_call.1} parent=1 // pred_check
      _
    $region59: #{tpu_custom_call.1} parent=1 // pred_check_branch
      %2482 = sbr.rel (0) target = $region61
    $region60: #{tpu_custom_call.1} parent=1 // pred_region
      %s2484 = ssub.s32 128, 128
      %2485 = vsyncadd [#allocation4], %s2484
      %s2487 = sshll.u32 [#allocation11], 4
      %s2488 = int_to_ptr.vmem [resolvable:$true] %s2487
      %2490 = dma.vmem_to_hbm [thread:$0]  %s2488, 128, %s9, [#allocation4]
    $region61: #{tpu_custom_call.1} parent=1 // pred_fallthru
      _
    // Predicated region
    $region62: #{tpu_custom_call.1} parent=1 // pred_check
      _
    $region63: #{tpu_custom_call.1} parent=1 // pred_check_branch
      %2492 = sbr.rel (0) target = $region65
    $region64: #{tpu_custom_call.1} parent=1 // pred_region
      %s2494 = ssub.s32 128, 128
      %2495 = vsyncadd [#allocation13], %s2494
      %s2497 = sshll.u32 [#allocation12], 4
      %s2498 = int_to_ptr.vmem [resolvable:$true] %s2497
      %2500 = dma.vmem_to_hbm [thread:$0]  %s2498, 128, %s10, [#allocation13]
    $region65: #{tpu_custom_call.1} parent=1 // pred_fallthru
      _
    // Predicated region
    $region66: #{tpu_custom_call.1} parent=1 // pred_check
      _
    $region67: #{tpu_custom_call.1} parent=1 // pred_check_branch
      %2502 = sbr.rel (0) target = $region69
    $region68: #{tpu_custom_call.1} parent=1 // pred_region
      %2503 = dma.done [#allocation4], 128
    $region69: #{tpu_custom_call.1} parent=1 // pred_fallthru
      _
    // Predicated region
    $region70: #{tpu_custom_call.1} parent=1 // pred_check
      _
    $region71: #{tpu_custom_call.1} parent=1 // pred_check_branch
      %2505 = sbr.rel (0) target = $region73
    $region72: #{tpu_custom_call.1} parent=1 // pred_region
      %2506 = dma.done [#allocation13], 128
    $region73: #{tpu_custom_call.1} parent=1 // pred_fallthru
      _
    %2507 = vsyncpa [#allocation3], 1
    %2508 = vsyncpa [#allocation6], 1
    %2509 = vsyncpa [#allocation9], 1
    %2510 = vsyncpa [#allocation4], 1
    %2511 = vsyncpa [#allocation13], 1

</llo_original>
